<compile_context>
chip_gen: v6e
topology: v6e:2x2x1
jax: 0.10.0
libtpu: 0.0.40
codegen_flags: <defaults>
</compile_context>

<pallas_src>
import functools

import jax
import jax.numpy as jnp
from jax.experimental import pallas as pl
from jax.experimental.pallas import tpu as pltpu

CHANNELS_IMG = 1
IMAGE_SIZE = 28
IN_FEATURES = CHANNELS_IMG * IMAGE_SIZE * IMAGE_SIZE  # 784
H1 = 512
H2 = 256
OUT = 1
OUT_PAD = 128                                         # lane-dense output slab


def _leaky_relu(x, slope=0.2):
    return jnp.where(x > 0, x, slope * x)


def discriminator_kernel(x_ref, w1_ref, b1_ref, w2_ref, b2_ref, w3_ref, b3_ref, o_ref):
    # x_ref: (TB, 784) f32; weights bf16; biases f32; o_ref: (TB, 128) f32 logits.
    x = x_ref[...].astype(jnp.bfloat16)                                     # one cheap VPU cast
    h1 = jnp.dot(x, w1_ref[...], preferred_element_type=jnp.float32) + b1_ref[...]
    h1 = _leaky_relu(h1)                                                    # f32 (TB, 512)
    h2 = jnp.dot(h1.astype(jnp.bfloat16), w2_ref[...],
                 preferred_element_type=jnp.float32) + b2_ref[...]
    h2 = _leaky_relu(h2)                                                    # f32 (TB, 256)
    h3 = jnp.dot(h2.astype(jnp.bfloat16), w3_ref[...],
                 preferred_element_type=jnp.float32) + b3_ref[...]          # f32 (TB, 128)
    o_ref[...] = h3                                 # lane-dense f32 logit store; sigmoid in wrapper


def _prep_params(params):
    """Cast / pad raw f32 params into the kernel layout."""
    w1, b1, w2, b2, w3, b3 = params
    w1p = w1.astype(jnp.bfloat16)                                          # (784, 512)
    w2p = w2.astype(jnp.bfloat16)                                          # (512, 256)
    w3p = jnp.pad(w3, ((0, 0), (0, OUT_PAD - OUT))).astype(jnp.bfloat16)   # (256, 128)
    b1p = b1.astype(jnp.float32)
    b2p = b2.astype(jnp.float32)
    b3p = jnp.pad(b3, ((0, 0), (0, OUT_PAD - OUT))).astype(jnp.float32)
    return w1p, b1p, w2p, b2p, w3p, b3p


@functools.partial(jax.jit, static_argnames=("tb",))
def discriminator_forward(x_nchw, params, tb=512):
    """x_nchw: (B, 1, 28, 28) float32 -> (B, 1) float32 probabilities."""
    w1p, b1p, w2p, b2p, w3p, b3p = _prep_params(params)

    B = x_nchw.shape[0]
    x = x_nchw.reshape(B, -1).astype(jnp.float32)                    # (B, 784), streamed as f32

    # Batch tile: multiple of 8 sublanes, capped at `tb`.
    b8 = ((B + 7) // 8) * 8
    TB = min(((tb + 7) // 8) * 8, b8)
    # Keep >= 2 grid steps when possible so v7x's two TensorCores both get work.
    if b8 <= TB and b8 >= 16:
        TB = ((b8 // 2 + 7) // 8) * 8
    nb = -(-b8 // TB)                # ceil
    Bp = nb * TB
    if Bp != B:
        x = jnp.pad(x, ((0, Bp - B), (0, 0)))                        # (Bp, 784)

    # Weights/biases: constant index_map => fetched once, VMEM-resident; a
    # single buffer is enough (they never change), freeing VMEM headroom.
    def resident(shape):
        return pl.BlockSpec(shape, lambda i: (0, 0), pipeline_mode=pl.Buffered(1))

    weight_bytes = ((w1p.size + w2p.size + w3p.size) * 2
                    + (b1p.size + b2p.size + b3p.size) * 4)
    cost = pl.CostEstimate(
        flops=2 * Bp * (IN_FEATURES * H1 + H1 * H2 + H2 * OUT_PAD),
        transcendentals=0,
        bytes_accessed=weight_bytes + Bp * IN_FEATURES * 4 + Bp * OUT_PAD * 4,
    )

    logits = pl.pallas_call(
        discriminator_kernel,
        out_shape=jax.ShapeDtypeStruct((Bp, OUT_PAD), jnp.float32),
        grid=(nb,),
        in_specs=[
            pl.BlockSpec((TB, IN_FEATURES), lambda i: (i, 0)),  # x: streamed per step (f32)
            resident((IN_FEATURES, H1)),                        # weights/biases: VMEM-resident
            resident((1, H1)),
            resident((H1, H2)),
            resident((1, H2)),
            resident((H2, OUT_PAD)),
            resident((1, OUT_PAD)),
        ],
        out_specs=pl.BlockSpec((TB, OUT_PAD), lambda i: (i, 0)),
        compiler_params=pltpu.CompilerParams(
            dimension_semantics=("parallel",),
        ),
        cost_estimate=cost,
    )(x, w1p, b1p, w2p, b2p, w3p, b3p)

    # Sigmoid only on the real (B, 1) column, in f32.
    return jax.nn.sigmoid(logits[:B, :OUT])


def init_params(key):
    """Deterministic init mimicking nn.Linear default: U(-1/sqrt(fan_in), 1/sqrt(fan_in))."""
    ks = jax.random.split(key, 6)

    def linear(kw, kb, fan_in, fan_out):
        bound = 1.0 / jnp.sqrt(jnp.float32(fan_in))
        w = jax.random.uniform(kw, (fan_in, fan_out), jnp.float32, -bound, bound)
        b = jax.random.uniform(kb, (1, fan_out), jnp.float32, -bound, bound)
        return w, b

    w1, b1 = linear(ks[0], ks[1], IN_FEATURES, H1)
    w2, b2 = linear(ks[2], ks[3], H1, H2)
    w3, b3 = linear(ks[4], ks[5], H2, OUT)
    return (w1, b1, w2, b2, w3, b3)


def reference_forward(x_nchw, params):
    """Pure-JAX reference using the same bf16 matmul inputs / f32 accumulation."""
    w1, b1, w2, b2, w3, b3 = params
    bf = jnp.bfloat16
    x = x_nchw.reshape(x_nchw.shape[0], -1).astype(jnp.float32).astype(bf)
    h1 = _leaky_relu(jnp.dot(x, w1.astype(bf), preferred_element_type=jnp.float32) + b1)
    h2 = _leaky_relu(jnp.dot(h1.astype(bf), w2.astype(bf),
                             preferred_element_type=jnp.float32) + b2)
    h3 = jnp.dot(h2.astype(bf), w3.astype(bf), preferred_element_type=jnp.float32) + b3
    return jax.nn.sigmoid(h3)


if __name__ == "__main__":
    key = jax.random.PRNGKey(0)
    k_params, k_x1, k_x2 = jax.random.split(key, 3)
    params = init_params(k_params)

    # Small demo batch (single grid step).
    B = 2
    x = jax.random.normal(k_x1, (B, CHANNELS_IMG, IMAGE_SIZE, IMAGE_SIZE), jnp.float32)
    out = jax.block_until_ready(discriminator_forward(x, params))
    ref = reference_forward(x, params)
    assert out.shape == (B, 1), out.shape
    assert jnp.allclose(out, ref, atol=1e-3, rtol=1e-3), (out, ref)

    # Exercise batch padding + multi-step grid pipeline (tb=8 -> 3 grid steps).
    B2 = 20
    x2 = jax.random.normal(k_x2, (B2, CHANNELS_IMG, IMAGE_SIZE, IMAGE_SIZE), jnp.float32)
    out2 = jax.block_until_ready(discriminator_forward(x2, params, tb=8))
    ref2 = reference_forward(x2, params)
    assert out2.shape == (B2, 1), out2.shape
    assert jnp.allclose(out2, ref2, atol=1e-3, rtol=1e-3), (out2, ref2)

    # Default tile path (splits B2 into two tiles so v7x can use both TCs).
    out3 = jax.block_until_ready(discriminator_forward(x2, params))
    assert jnp.allclose(out3, ref2, atol=1e-3, rtol=1e-3), (out3, ref2)

    print("KERNEL_OK")
</pallas_src>

<mosaic_0001>
module attributes {stable_mosaic.version = 11 : i64} {
  func.func @discriminator_kernel(%arg0: i32, %arg1: memref<8x784xf32, #tpu.memory_space<vmem>>, %arg2: memref<784x512xbf16, #tpu.memory_space<vmem>>, %arg3: memref<1x512xf32, #tpu.memory_space<vmem>>, %arg4: memref<512x256xbf16, #tpu.memory_space<vmem>>, %arg5: memref<1x256xf32, #tpu.memory_space<vmem>>, %arg6: memref<256x128xbf16, #tpu.memory_space<vmem>>, %arg7: memref<1x128xf32, #tpu.memory_space<vmem>>, %arg8: memref<8x128xf32, #tpu.memory_space<vmem>>) attributes {dimension_semantics = [#tpu.dimension_semantics<parallel>], iteration_bounds = array<i64: 1>, scalar_prefetch = 0 : i64, scratch_operands = 0 : i64, tpu.core_type = #tpu.core_type<tc>, window_params = [{transform_indices = @transform_0, window_bounds = array<i64: 8, 784>}, {pipeline_mode = #tpu.pipeline_mode<synchronous>, transform_indices = @transform_1, window_bounds = array<i64: 784, 512>}, {pipeline_mode = #tpu.pipeline_mode<synchronous>, transform_indices = @transform_2, window_bounds = array<i64: 1, 512>}, {pipeline_mode = #tpu.pipeline_mode<synchronous>, transform_indices = @transform_3, window_bounds = array<i64: 512, 256>}, {pipeline_mode = #tpu.pipeline_mode<synchronous>, transform_indices = @transform_4, window_bounds = array<i64: 1, 256>}, {pipeline_mode = #tpu.pipeline_mode<synchronous>, transform_indices = @transform_5, window_bounds = array<i64: 256, 128>}, {pipeline_mode = #tpu.pipeline_mode<synchronous>, transform_indices = @transform_6, window_bounds = array<i64: 1, 128>}, {transform_indices = @transform_7, window_bounds = array<i64: 8, 128>}]} {
    %c0 = arith.constant 0 : index
    %c0_0 = arith.constant 0 : index
    %0 = vector.load %arg1[%c0, %c0_0] : memref<8x784xf32, #tpu.memory_space<vmem>>, vector<8x784xf32>
    %1 = arith.truncf %0 : vector<8x784xf32> to vector<8x784xbf16>
    %c0_1 = arith.constant 0 : index
    %c0_2 = arith.constant 0 : index
    %2 = vector.load %arg2[%c0_1, %c0_2] : memref<784x512xbf16, #tpu.memory_space<vmem>>, vector<784x512xbf16>
    %cst = arith.constant dense<0.000000e+00> : vector<8x512xf32>
    %3 = tpu.matmul %1, %2, %cst {dimension_numbers = #tpu.dot_dimension_numbers<[1], [0], [0], [1], [0, 0, 1, 1], [], []>} : vector<8x784xbf16>, vector<784x512xbf16>, vector<8x512xf32> -> vector<8x512xf32>
    %c0_3 = arith.constant 0 : index
    %c0_4 = arith.constant 0 : index
    %4 = vector.load %arg3[%c0_3, %c0_4] : memref<1x512xf32, #tpu.memory_space<vmem>>, vector<1x512xf32>
    %5 = vector.broadcast %4 : vector<1x512xf32> to vector<8x512xf32>
    %6 = arith.addf %3, %5 : vector<8x512xf32>
    %cst_5 = arith.constant 0.000000e+00 : f32
    %7 = vector.broadcast %cst_5 : f32 to vector<8x512xf32>
    %8 = arith.cmpf ogt, %6, %7 : vector<8x512xf32>
    %cst_6 = arith.constant 2.000000e-01 : f32
    %9 = vector.broadcast %cst_6 : f32 to vector<8x512xf32>
    %10 = arith.mulf %9, %6 : vector<8x512xf32>
    %11 = arith.select %8, %6, %10 : vector<8x512xi1>, vector<8x512xf32>
    %12 = arith.truncf %11 : vector<8x512xf32> to vector<8x512xbf16>
    %c0_7 = arith.constant 0 : index
    %c0_8 = arith.constant 0 : index
    %13 = vector.load %arg4[%c0_7, %c0_8] : memref<512x256xbf16, #tpu.memory_space<vmem>>, vector<512x256xbf16>
    %cst_9 = arith.constant dense<0.000000e+00> : vector<8x256xf32>
    %14 = tpu.matmul %12, %13, %cst_9 {dimension_numbers = #tpu.dot_dimension_numbers<[1], [0], [0], [1], [0, 0, 1, 1], [], []>} : vector<8x512xbf16>, vector<512x256xbf16>, vector<8x256xf32> -> vector<8x256xf32>
    %c0_10 = arith.constant 0 : index
    %c0_11 = arith.constant 0 : index
    %15 = vector.load %arg5[%c0_10, %c0_11] : memref<1x256xf32, #tpu.memory_space<vmem>>, vector<1x256xf32>
    %16 = vector.broadcast %15 : vector<1x256xf32> to vector<8x256xf32>
    %17 = arith.addf %14, %16 : vector<8x256xf32>
    %cst_12 = arith.constant 0.000000e+00 : f32
    %18 = vector.broadcast %cst_12 : f32 to vector<8x256xf32>
    %19 = arith.cmpf ogt, %17, %18 : vector<8x256xf32>
    %cst_13 = arith.constant 2.000000e-01 : f32
    %20 = vector.broadcast %cst_13 : f32 to vector<8x256xf32>
    %21 = arith.mulf %20, %17 : vector<8x256xf32>
    %22 = arith.select %19, %17, %21 : vector<8x256xi1>, vector<8x256xf32>
    %23 = arith.truncf %22 : vector<8x256xf32> to vector<8x256xbf16>
    %c0_14 = arith.constant 0 : index
    %c0_15 = arith.constant 0 : index
    %24 = vector.load %arg6[%c0_14, %c0_15] : memref<256x128xbf16, #tpu.memory_space<vmem>>, vector<256x128xbf16>
    %cst_16 = arith.constant dense<0.000000e+00> : vector<8x128xf32>
    %25 = tpu.matmul %23, %24, %cst_16 {dimension_numbers = #tpu.dot_dimension_numbers<[1], [0], [0], [1], [0, 0, 1, 1], [], []>} : vector<8x256xbf16>, vector<256x128xbf16>, vector<8x128xf32> -> vector<8x128xf32>
    %c0_17 = arith.constant 0 : index
    %c0_18 = arith.constant 0 : index
    %26 = vector.load %arg7[%c0_17, %c0_18] : memref<1x128xf32, #tpu.memory_space<vmem>>, vector<1x128xf32>
    %27 = vector.broadcast %26 : vector<1x128xf32> to vector<8x128xf32>
    %28 = arith.addf %25, %27 : vector<8x128xf32>
    %c0_19 = arith.constant 0 : index
    %c0_20 = arith.constant 0 : index
    %29 = vector.load %arg8[%c0_19, %c0_20] : memref<8x128xf32, #tpu.memory_space<vmem>>, vector<8x128xf32>
    tpu.vector_store %arg8[%c0_19, %c0_20], %28 {strides = array<i32>} : memref<8x128xf32, #tpu.memory_space<vmem>>, vector<8x128xf32>,
    return
  }
  func.func @transform_0(%arg0: i32) -> (i32, i32) {
    %c0_i32 = arith.constant 0 : i32
    %c0_i32_0 = arith.constant 0 : i32
    return %arg0, %c0_i32 : i32, i32
  }
  func.func @transform_1(%arg0: i32) -> (i32, i32) {
    %c0_i32 = arith.constant 0 : i32
    %c0_i32_0 = arith.constant 0 : i32
    %c0_i32_1 = arith.constant 0 : i32
    return %c0_i32, %c0_i32_0 : i32, i32
  }
  func.func @transform_2(%arg0: i32) -> (i32, i32) {
    %c0_i32 = arith.constant 0 : i32
    %c0_i32_0 = arith.constant 0 : i32
    %c0_i32_1 = arith.constant 0 : i32
    return %c0_i32, %c0_i32_0 : i32, i32
  }
  func.func @transform_3(%arg0: i32) -> (i32, i32) {
    %c0_i32 = arith.constant 0 : i32
    %c0_i32_0 = arith.constant 0 : i32
    %c0_i32_1 = arith.constant 0 : i32
    return %c0_i32, %c0_i32_0 : i32, i32
  }
  func.func @transform_4(%arg0: i32) -> (i32, i32) {
    %c0_i32 = arith.constant 0 : i32
    %c0_i32_0 = arith.constant 0 : i32
    %c0_i32_1 = arith.constant 0 : i32
    return %c0_i32, %c0_i32_0 : i32, i32
  }
  func.func @transform_5(%arg0: i32) -> (i32, i32) {
    %c0_i32 = arith.constant 0 : i32
    %c0_i32_0 = arith.constant 0 : i32
    %c0_i32_1 = arith.constant 0 : i32
    return %c0_i32, %c0_i32_0 : i32, i32
  }
  func.func @transform_6(%arg0: i32) -> (i32, i32) {
    %c0_i32 = arith.constant 0 : i32
    %c0_i32_0 = arith.constant 0 : i32
    %c0_i32_1 = arith.constant 0 : i32
    return %c0_i32, %c0_i32_0 : i32, i32
  }
  func.func @transform_7(%arg0: i32) -> (i32, i32) {
    %c0_i32 = arith.constant 0 : i32
    %c0_i32_0 = arith.constant 0 : i32
    return %arg0, %c0_i32 : i32, i32
  }
}

</mosaic_0001>

<llo_original>
// kernel: discriminator_forward.1
$region0: #{discriminator_forward.1}
  #allocation0 [shape = 'u32[]', space=smem, size = 0x4, offset = 0x4, fixed_abs, tag = 'smem constant byte address 0x4 - core index']
  #allocation1 [shape = 'u32[144,128]{1,0:T(1,128)}', space=vmem, size = 0x12000, scoped, tag = 'internal scratch']
  %s0 = inlined_call_operand.vmem [shape: f32[8,784], index: 0, kind: input, shape index: {}]
  %s1 = inlined_call_operand.vmem [shape: bf16[784,512], index: 1, kind: input, shape index: {}]
  %s2 = inlined_call_operand.vmem [shape: f32[1,512], index: 2, kind: input, shape index: {}]
  %s3 = inlined_call_operand.vmem [shape: bf16[512,256], index: 3, kind: input, shape index: {}]
  %s4 = inlined_call_operand.vmem [shape: f32[1,256], index: 4, kind: input, shape index: {}]
  %s5 = inlined_call_operand.vmem [shape: bf16[256,128], index: 5, kind: input, shape index: {}]
  %s6 = inlined_call_operand.vmem [shape: f32[1,128], index: 6, kind: input, shape index: {}]
  %s7 = inlined_call_operand.vmem [shape: f32[8,128], index: 7, kind: output, shape index: {}]
  %s8 = sld [smem:[#allocation0]]
  $region38: #{discriminator_forward.1} parent=0
    _
  %s10 = ssub.s32 1, %s8
  %s11 = scalar_select 0, %s10, %s8
  // Predicated region
  $region2: #{discriminator_forward.1} parent=0 // pred_check
    _
  $region3: #{discriminator_forward.1} parent=0 // pred_check_branch
    %13 = sbr.rel (0) target = $region5
  $region4: #{discriminator_forward.1} parent=0 // pred_region
    _
  $region5: #{discriminator_forward.1} parent=0 // pred_fallthru
    _
  // Predicated region
  $region6: #{discriminator_forward.1} parent=0 // pred_check
    _
  $region7: #{discriminator_forward.1} parent=0 // pred_check_branch
    %15 = sbr.rel (0) target = $region9
  $region8: #{discriminator_forward.1} parent=0 // pred_region
    _
  $region9: #{discriminator_forward.1} parent=0 // pred_fallthru
    _
  // Predicated region
  $region10: #{discriminator_forward.1} parent=0 // pred_check
    _
  $region11: #{discriminator_forward.1} parent=0 // pred_check_branch
    %17 = sbr.rel (0) target = $region13
  $region12: #{discriminator_forward.1} parent=0 // pred_region
    _
  $region13: #{discriminator_forward.1} parent=0 // pred_fallthru
    _
  // Predicated region
  $region14: #{discriminator_forward.1} parent=0 // pred_check
    _
  $region15: #{discriminator_forward.1} parent=0 // pred_check_branch
    %19 = sbr.rel (0) target = $region17
  $region16: #{discriminator_forward.1} parent=0 // pred_region
    _
  $region17: #{discriminator_forward.1} parent=0 // pred_fallthru
    _
  // Predicated region
  $region18: #{discriminator_forward.1} parent=0 // pred_check
    _
  $region19: #{discriminator_forward.1} parent=0 // pred_check_branch
    %21 = sbr.rel (0) target = $region21
  $region20: #{discriminator_forward.1} parent=0 // pred_region
    _
  $region21: #{discriminator_forward.1} parent=0 // pred_fallthru
    _
  // Predicated region
  $region22: #{discriminator_forward.1} parent=0 // pred_check
    _
  $region23: #{discriminator_forward.1} parent=0 // pred_check_branch
    %23 = sbr.rel (0) target = $region25
  $region24: #{discriminator_forward.1} parent=0 // pred_region
    _
  $region25: #{discriminator_forward.1} parent=0 // pred_fallthru
    _
  // Predicated region
  $region26: #{discriminator_forward.1} parent=0 // pred_check
    _
  $region27: #{discriminator_forward.1} parent=0 // pred_check_branch
    %25 = sbr.rel (0) target = $region29
  $region28: #{discriminator_forward.1} parent=0 // pred_region
    _
  $region29: #{discriminator_forward.1} parent=0 // pred_fallthru
    _
  %v27 = vld [vmem:[%s0] sm:$0xff]
  %v28 = vld [vmem:[%s0 + $0x8] sm:$0xff]
  %v29 = vld [vmem:[%s0 + $0x10] sm:$0xff]
  %v30 = vld [vmem:[%s0 + $0x18] sm:$0xff]
  %v31 = vld [vmem:[%s0 + $0x20] sm:$0xff]
  %v32 = vld [vmem:[%s0 + $0x28] sm:$0xff]
  %v33 = vld [vmem:[%s0 + $0x30] sm:$0xff]
  %v34 = vpack.c.bf16 %v27, %v27
  %v35 = vpack.c.bf16 %v28, %v28
  %v36 = vpack.c.bf16 %v29, %v29
  %v37 = vpack.c.bf16 %v30, %v30
  %v38 = vpack.c.bf16 %v31, %v31
  %v39 = vpack.c.bf16 %v32, %v32
  %v40 = vpack.c.bf16 %v33, %v33
  %v41 = vld [vmem:[%s1] sm:$0xff]
  %v42 = vld [vmem:[%s1 + $0x8] sm:$0xff]
  %v43 = vld [vmem:[%s1 + $0x10] sm:$0xff]
  %v44 = vld [vmem:[%s1 + $0x18] sm:$0xff]
  %v45 = vld [vmem:[%s1 + $0x20] sm:$0xff]
  %v46 = vld [vmem:[%s1 + $0x28] sm:$0xff]
  %v47 = vld [vmem:[%s1 + $0x30] sm:$0xff]
  %v48 = vld [vmem:[%s1 + $0x38] sm:$0xff]
  %v49 = vld [vmem:[%s1 + $0x40] sm:$0xff]
  %v50 = vld [vmem:[%s1 + $0x48] sm:$0xff]
  %v51 = vld [vmem:[%s1 + $0x50] sm:$0xff]
  %v52 = vld [vmem:[%s1 + $0x58] sm:$0xff]
  %v53 = vld [vmem:[%s1 + $0x60] sm:$0xff]
  %v54 = vld [vmem:[%s1 + $0x68] sm:$0xff]
  %v55 = vld [vmem:[%s1 + $0x70] sm:$0xff]
  %v56 = vld [vmem:[%s1 + $0x78] sm:$0xff]
  %v57 = vld [vmem:[%s1 + $0x80] sm:$0xff]
  %v58 = vld [vmem:[%s1 + $0x88] sm:$0xff]
  %v59 = vld [vmem:[%s1 + $0x90] sm:$0xff]
  %v60 = vld [vmem:[%s1 + $0x98] sm:$0xff]
  %v61 = vld [vmem:[%s1 + $0xa0] sm:$0xff]
  %v62 = vld [vmem:[%s1 + $0xa8] sm:$0xff]
  %v63 = vld [vmem:[%s1 + $0xb0] sm:$0xff]
  %v64 = vld [vmem:[%s1 + $0xb8] sm:$0xff]
  %v65 = vld [vmem:[%s1 + $0xc0] sm:$0xff]
  %v66 = vld [vmem:[%s1 + $0xc8] sm:$0xff]
  %v67 = vld [vmem:[%s1 + $0xd0] sm:$0xff]
  %v68 = vld [vmem:[%s1 + $0xd8] sm:$0xff]
  %v69 = vld [vmem:[%s1 + $0xe0] sm:$0xff]
  %v70 = vld [vmem:[%s1 + $0xe8] sm:$0xff]
  %v71 = vld [vmem:[%s1 + $0xf0] sm:$0xff]
  %v72 = vld [vmem:[%s1 + $0xf8] sm:$0xff]
  %v73 = vld [vmem:[%s1 + $0x100] sm:$0xff]
  %v74 = vld [vmem:[%s1 + $0x108] sm:$0xff]
  %v75 = vld [vmem:[%s1 + $0x110] sm:$0xff]
  %v76 = vld [vmem:[%s1 + $0x118] sm:$0xff]
  %v77 = vld [vmem:[%s1 + $0x120] sm:$0xff]
  %v78 = vld [vmem:[%s1 + $0x128] sm:$0xff]
  %v79 = vld [vmem:[%s1 + $0x130] sm:$0xff]
  %v80 = vld [vmem:[%s1 + $0x138] sm:$0xff]
  %v81 = vld [vmem:[%s1 + $0x140] sm:$0xff]
  %v82 = vld [vmem:[%s1 + $0x148] sm:$0xff]
  %v83 = vld [vmem:[%s1 + $0x150] sm:$0xff]
  %v84 = vld [vmem:[%s1 + $0x158] sm:$0xff]
  %v85 = vld [vmem:[%s1 + $0x160] sm:$0xff]
  %v86 = vld [vmem:[%s1 + $0x168] sm:$0xff]
  %v87 = vld [vmem:[%s1 + $0x170] sm:$0xff]
  %v88 = vld [vmem:[%s1 + $0x178] sm:$0xff]
  %v89 = vld [vmem:[%s1 + $0x180] sm:$0xff]
  %v90 = vld [vmem:[%s1 + $0x188] sm:$0xff]
  %v91 = vld [vmem:[%s1 + $0x190] sm:$0xff]
  %v92 = vld [vmem:[%s1 + $0x198] sm:$0xff]
  %v93 = vld [vmem:[%s1 + $0x1a0] sm:$0xff]
  %v94 = vld [vmem:[%s1 + $0x1a8] sm:$0xff]
  %v95 = vld [vmem:[%s1 + $0x1b0] sm:$0xff]
  %v96 = vld [vmem:[%s1 + $0x1b8] sm:$0xff]
  %v97 = vld [vmem:[%s1 + $0x1c0] sm:$0xff]
  %v98 = vld [vmem:[%s1 + $0x1c8] sm:$0xff]
  %v99 = vld [vmem:[%s1 + $0x1d0] sm:$0xff]
  %v100 = vld [vmem:[%s1 + $0x1d8] sm:$0xff]
  %v101 = vld [vmem:[%s1 + $0x1e0] sm:$0xff]
  %v102 = vld [vmem:[%s1 + $0x1e8] sm:$0xff]
  %v103 = vld [vmem:[%s1 + $0x1f0] sm:$0xff]
  %v104 = vld [vmem:[%s1 + $0x1f8] sm:$0xff]
  %v105 = vld [vmem:[%s1 + $0x200] sm:$0xff]
  %v106 = vld [vmem:[%s1 + $0x208] sm:$0xff]
  %v107 = vld [vmem:[%s1 + $0x210] sm:$0xff]
  %v108 = vld [vmem:[%s1 + $0x218] sm:$0xff]
  %v109 = vld [vmem:[%s1 + $0x220] sm:$0xff]
  %v110 = vld [vmem:[%s1 + $0x228] sm:$0xff]
  %v111 = vld [vmem:[%s1 + $0x230] sm:$0xff]
  %v112 = vld [vmem:[%s1 + $0x238] sm:$0xff]
  %v113 = vld [vmem:[%s1 + $0x240] sm:$0xff]
  %v114 = vld [vmem:[%s1 + $0x248] sm:$0xff]
  %v115 = vld [vmem:[%s1 + $0x250] sm:$0xff]
  %v116 = vld [vmem:[%s1 + $0x258] sm:$0xff]
  %v117 = vld [vmem:[%s1 + $0x260] sm:$0xff]
  %v118 = vld [vmem:[%s1 + $0x268] sm:$0xff]
  %v119 = vld [vmem:[%s1 + $0x270] sm:$0xff]
  %v120 = vld [vmem:[%s1 + $0x278] sm:$0xff]
  %v121 = vld [vmem:[%s1 + $0x280] sm:$0xff]
  %v122 = vld [vmem:[%s1 + $0x288] sm:$0xff]
  %v123 = vld [vmem:[%s1 + $0x290] sm:$0xff]
  %v124 = vld [vmem:[%s1 + $0x298] sm:$0xff]
  %v125 = vld [vmem:[%s1 + $0x2a0] sm:$0xff]
  %v126 = vld [vmem:[%s1 + $0x2a8] sm:$0xff]
  %v127 = vld [vmem:[%s1 + $0x2b0] sm:$0xff]
  %v128 = vld [vmem:[%s1 + $0x2b8] sm:$0xff]
  %v129 = vld [vmem:[%s1 + $0x2c0] sm:$0xff]
  %v130 = vld [vmem:[%s1 + $0x2c8] sm:$0xff]
  %v131 = vld [vmem:[%s1 + $0x2d0] sm:$0xff]
  %v132 = vld [vmem:[%s1 + $0x2d8] sm:$0xff]
  %v133 = vld [vmem:[%s1 + $0x2e0] sm:$0xff]
  %v134 = vld [vmem:[%s1 + $0x2e8] sm:$0xff]
  %v135 = vld [vmem:[%s1 + $0x2f0] sm:$0xff]
  %v136 = vld [vmem:[%s1 + $0x2f8] sm:$0xff]
  %v137 = vld [vmem:[%s1 + $0x300] sm:$0xff]
  %v138 = vld [vmem:[%s1 + $0x308] sm:$0xff]
  %v139 = vld [vmem:[%s1 + $0x310] sm:$0xff]
  %v140 = vld [vmem:[%s1 + $0x318] sm:$0xff]
  %v141 = vld [vmem:[%s1 + $0x320] sm:$0xff]
  %v142 = vld [vmem:[%s1 + $0x328] sm:$0xff]
  %v143 = vld [vmem:[%s1 + $0x330] sm:$0xff]
  %v144 = vld [vmem:[%s1 + $0x338] sm:$0xff]
  %v145 = vld [vmem:[%s1 + $0x340] sm:$0xff]
  %v146 = vld [vmem:[%s1 + $0x348] sm:$0xff]
  %v147 = vld [vmem:[%s1 + $0x350] sm:$0xff]
  %v148 = vld [vmem:[%s1 + $0x358] sm:$0xff]
  %v149 = vld [vmem:[%s1 + $0x360] sm:$0xff]
  %v150 = vld [vmem:[%s1 + $0x368] sm:$0xff]
  %v151 = vld [vmem:[%s1 + $0x370] sm:$0xff]
  %v152 = vld [vmem:[%s1 + $0x378] sm:$0xff]
  %v153 = vld [vmem:[%s1 + $0x380] sm:$0xff]
  %v154 = vld [vmem:[%s1 + $0x388] sm:$0xff]
  %v155 = vld [vmem:[%s1 + $0x390] sm:$0xff]
  %v156 = vld [vmem:[%s1 + $0x398] sm:$0xff]
  %v157 = vld [vmem:[%s1 + $0x3a0] sm:$0xff]
  %v158 = vld [vmem:[%s1 + $0x3a8] sm:$0xff]
  %v159 = vld [vmem:[%s1 + $0x3b0] sm:$0xff]
  %v160 = vld [vmem:[%s1 + $0x3b8] sm:$0xff]
  %v161 = vld [vmem:[%s1 + $0x3c0] sm:$0xff]
  %v162 = vld [vmem:[%s1 + $0x3c8] sm:$0xff]
  %v163 = vld [vmem:[%s1 + $0x3d0] sm:$0xff]
  %v164 = vld [vmem:[%s1 + $0x3d8] sm:$0xff]
  %v165 = vld [vmem:[%s1 + $0x3e0] sm:$0xff]
  %v166 = vld [vmem:[%s1 + $0x3e8] sm:$0xff]
  %v167 = vld [vmem:[%s1 + $0x3f0] sm:$0xff]
  %v168 = vld [vmem:[%s1 + $0x3f8] sm:$0xff]
  %v169 = vld [vmem:[%s1 + $0x400] sm:$0xff]
  %v170 = vld [vmem:[%s1 + $0x408] sm:$0xff]
  %v171 = vld [vmem:[%s1 + $0x410] sm:$0xff]
  %v172 = vld [vmem:[%s1 + $0x418] sm:$0xff]
  %v173 = vld [vmem:[%s1 + $0x420] sm:$0xff]
  %v174 = vld [vmem:[%s1 + $0x428] sm:$0xff]
  %v175 = vld [vmem:[%s1 + $0x430] sm:$0xff]
  %v176 = vld [vmem:[%s1 + $0x438] sm:$0xff]
  %v177 = vld [vmem:[%s1 + $0x440] sm:$0xff]
  %v178 = vld [vmem:[%s1 + $0x448] sm:$0xff]
  %v179 = vld [vmem:[%s1 + $0x450] sm:$0xff]
  %v180 = vld [vmem:[%s1 + $0x458] sm:$0xff]
  %v181 = vld [vmem:[%s1 + $0x460] sm:$0xff]
  %v182 = vld [vmem:[%s1 + $0x468] sm:$0xff]
  %v183 = vld [vmem:[%s1 + $0x470] sm:$0xff]
  %v184 = vld [vmem:[%s1 + $0x478] sm:$0xff]
  %v185 = vld [vmem:[%s1 + $0x480] sm:$0xff]
  %v186 = vld [vmem:[%s1 + $0x488] sm:$0xff]
  %v187 = vld [vmem:[%s1 + $0x490] sm:$0xff]
  %v188 = vld [vmem:[%s1 + $0x498] sm:$0xff]
  %v189 = vld [vmem:[%s1 + $0x4a0] sm:$0xff]
  %v190 = vld [vmem:[%s1 + $0x4a8] sm:$0xff]
  %v191 = vld [vmem:[%s1 + $0x4b0] sm:$0xff]
  %v192 = vld [vmem:[%s1 + $0x4b8] sm:$0xff]
  %v193 = vld [vmem:[%s1 + $0x4c0] sm:$0xff]
  %v194 = vld [vmem:[%s1 + $0x4c8] sm:$0xff]
  %v195 = vld [vmem:[%s1 + $0x4d0] sm:$0xff]
  %v196 = vld [vmem:[%s1 + $0x4d8] sm:$0xff]
  %v197 = vld [vmem:[%s1 + $0x4e0] sm:$0xff]
  %v198 = vld [vmem:[%s1 + $0x4e8] sm:$0xff]
  %v199 = vld [vmem:[%s1 + $0x4f0] sm:$0xff]
  %v200 = vld [vmem:[%s1 + $0x4f8] sm:$0xff]
  %v201 = vld [vmem:[%s1 + $0x500] sm:$0xff]
  %v202 = vld [vmem:[%s1 + $0x508] sm:$0xff]
  %v203 = vld [vmem:[%s1 + $0x510] sm:$0xff]
  %v204 = vld [vmem:[%s1 + $0x518] sm:$0xff]
  %v205 = vld [vmem:[%s1 + $0x520] sm:$0xff]
  %v206 = vld [vmem:[%s1 + $0x528] sm:$0xff]
  %v207 = vld [vmem:[%s1 + $0x530] sm:$0xff]
  %v208 = vld [vmem:[%s1 + $0x538] sm:$0xff]
  %v209 = vld [vmem:[%s1 + $0x540] sm:$0xff]
  %v210 = vld [vmem:[%s1 + $0x548] sm:$0xff]
  %v211 = vld [vmem:[%s1 + $0x550] sm:$0xff]
  %v212 = vld [vmem:[%s1 + $0x558] sm:$0xff]
  %v213 = vld [vmem:[%s1 + $0x560] sm:$0xff]
  %v214 = vld [vmem:[%s1 + $0x568] sm:$0xff]
  %v215 = vld [vmem:[%s1 + $0x570] sm:$0xff]
  %v216 = vld [vmem:[%s1 + $0x578] sm:$0xff]
  %v217 = vld [vmem:[%s1 + $0x580] sm:$0xff]
  %v218 = vld [vmem:[%s1 + $0x588] sm:$0xff]
  %v219 = vld [vmem:[%s1 + $0x590] sm:$0xff]
  %v220 = vld [vmem:[%s1 + $0x598] sm:$0xff]
  %v221 = vld [vmem:[%s1 + $0x5a0] sm:$0xff]
  %v222 = vld [vmem:[%s1 + $0x5a8] sm:$0xff]
  %v223 = vld [vmem:[%s1 + $0x5b0] sm:$0xff]
  %v224 = vld [vmem:[%s1 + $0x5b8] sm:$0xff]
  %v225 = vld [vmem:[%s1 + $0x5c0] sm:$0xff]
  %v226 = vld [vmem:[%s1 + $0x5c8] sm:$0xff]
  %v227 = vld [vmem:[%s1 + $0x5d0] sm:$0xff]
  %v228 = vld [vmem:[%s1 + $0x5d8] sm:$0xff]
  %v229 = vld [vmem:[%s1 + $0x5e0] sm:$0xff]
  %v230 = vld [vmem:[%s1 + $0x5e8] sm:$0xff]
  %v231 = vld [vmem:[%s1 + $0x5f0] sm:$0xff]
  %v232 = vld [vmem:[%s1 + $0x5f8] sm:$0xff]
  %v233 = vld [vmem:[%s1 + $0x600] sm:$0xff]
  %v234 = vld [vmem:[%s1 + $0x608] sm:$0xff]
  %v235 = vld [vmem:[%s1 + $0x610] sm:$0xff]
  %v236 = vld [vmem:[%s1 + $0x618] sm:$0xff]
  %v237 = vld [vmem:[%s2] sm:$0xf]
  %v239 = vlaneseq
  %v240 = vshrl.u32 %v239, 7
  %v241 = vsub.s32 0, %v240
  %v242 = vrot.slane %v237, %v241
  %v243 = vlaneseq
  %v244 = vshrl.u32 %v243, 7
  %v245 = vsub.s32 1, %v244
  %v246 = vrot.slane %v237, %v245
  %v247 = vlaneseq
  %v248 = vshrl.u32 %v247, 7
  %v249 = vsub.s32 2, %v248
  %v250 = vrot.slane %v237, %v249
  %v251 = vlaneseq
  %v252 = vshrl.u32 %v251, 7
  %v253 = vsub.s32 3, %v252
  %v254 = vrot.slane %v237, %v253
  %v455 = vunpack.c.l.b16 %v41
  %v456 = vunpack.c.h.b16 %v41
  %v457 = vunpack.c.l.b16 %v42
  %v458 = vunpack.c.h.b16 %v42
  %v459 = vunpack.c.l.b16 %v43
  %v460 = vunpack.c.h.b16 %v43
  %v461 = vunpack.c.l.b16 %v44
  %v462 = vunpack.c.h.b16 %v44
  %v463 = vunpack.c.l.b16 %v45
  %v464 = vunpack.c.h.b16 %v45
  %v465 = vunpack.c.l.b16 %v46
  %v466 = vunpack.c.h.b16 %v46
  %v467 = vunpack.c.l.b16 %v47
  %v468 = vunpack.c.h.b16 %v47
  %v469 = vunpack.c.l.b16 %v48
  %v470 = vunpack.c.h.b16 %v48
  %v471 = vunpack.c.l.b16 %v49
  %v472 = vunpack.c.h.b16 %v49
  %v473 = vunpack.c.l.b16 %v50
  %v474 = vunpack.c.h.b16 %v50
  %v475 = vunpack.c.l.b16 %v51
  %v476 = vunpack.c.h.b16 %v51
  %v477 = vunpack.c.l.b16 %v52
  %v478 = vunpack.c.h.b16 %v52
  %v479 = vunpack.c.l.b16 %v53
  %v480 = vunpack.c.h.b16 %v53
  %v481 = vunpack.c.l.b16 %v54
  %v482 = vunpack.c.h.b16 %v54
  %v483 = vunpack.c.l.b16 %v55
  %v484 = vunpack.c.h.b16 %v55
  %v485 = vunpack.c.l.b16 %v56
  %v486 = vunpack.c.h.b16 %v56
  %v487 = vunpack.c.l.b16 %v57
  %v488 = vunpack.c.h.b16 %v57
  %v489 = vunpack.c.l.b16 %v58
  %v490 = vunpack.c.h.b16 %v58
  %v491 = vunpack.c.l.b16 %v59
  %v492 = vunpack.c.h.b16 %v59
  %v493 = vunpack.c.l.b16 %v60
  %v494 = vunpack.c.h.b16 %v60
  %v495 = vunpack.c.l.b16 %v61
  %v496 = vunpack.c.h.b16 %v61
  %v497 = vunpack.c.l.b16 %v62
  %v498 = vunpack.c.h.b16 %v62
  %v499 = vunpack.c.l.b16 %v63
  %v500 = vunpack.c.h.b16 %v63
  %v501 = vunpack.c.l.b16 %v64
  %v502 = vunpack.c.h.b16 %v64
  %v503 = vunpack.c.l.b16 %v65
  %v504 = vunpack.c.h.b16 %v65
  %v505 = vunpack.c.l.b16 %v66
  %v506 = vunpack.c.h.b16 %v66
  %v507 = vunpack.c.l.b16 %v67
  %v508 = vunpack.c.h.b16 %v67
  %v509 = vunpack.c.l.b16 %v68
  %v510 = vunpack.c.h.b16 %v68
  %v511 = vunpack.c.l.b16 %v69
  %v512 = vunpack.c.h.b16 %v69
  %v513 = vunpack.c.l.b16 %v70
  %v514 = vunpack.c.h.b16 %v70
  %v515 = vunpack.c.l.b16 %v71
  %v516 = vunpack.c.h.b16 %v71
  %v517 = vunpack.c.l.b16 %v72
  %v518 = vunpack.c.h.b16 %v72
  %v519 = vunpack.c.l.b16 %v73
  %v520 = vunpack.c.h.b16 %v73
  %v521 = vunpack.c.l.b16 %v74
  %v522 = vunpack.c.h.b16 %v74
  %v523 = vunpack.c.l.b16 %v75
  %v524 = vunpack.c.h.b16 %v75
  %v525 = vunpack.c.l.b16 %v76
  %v526 = vunpack.c.h.b16 %v76
  %v527 = vunpack.c.l.b16 %v77
  %v528 = vunpack.c.h.b16 %v77
  %v529 = vunpack.c.l.b16 %v78
  %v530 = vunpack.c.h.b16 %v78
  %v531 = vunpack.c.l.b16 %v79
  %v532 = vunpack.c.h.b16 %v79
  %v533 = vunpack.c.l.b16 %v80
  %v534 = vunpack.c.h.b16 %v80
  %v535 = vunpack.c.l.b16 %v81
  %v536 = vunpack.c.h.b16 %v81
  %v537 = vunpack.c.l.b16 %v82
  %v538 = vunpack.c.h.b16 %v82
  %v539 = vunpack.c.l.b16 %v83
  %v540 = vunpack.c.h.b16 %v83
  %v541 = vunpack.c.l.b16 %v84
  %v542 = vunpack.c.h.b16 %v84
  %v543 = vunpack.c.l.b16 %v85
  %v544 = vunpack.c.h.b16 %v85
  %v545 = vunpack.c.l.b16 %v86
  %v546 = vunpack.c.h.b16 %v86
  %v547 = vunpack.c.l.b16 %v87
  %v548 = vunpack.c.h.b16 %v87
  %v549 = vunpack.c.l.b16 %v88
  %v550 = vunpack.c.h.b16 %v88
  %v551 = vunpack.c.l.b16 %v89
  %v552 = vunpack.c.h.b16 %v89
  %v553 = vunpack.c.l.b16 %v90
  %v554 = vunpack.c.h.b16 %v90
  %v555 = vunpack.c.l.b16 %v91
  %v556 = vunpack.c.h.b16 %v91
  %v557 = vunpack.c.l.b16 %v92
  %v558 = vunpack.c.h.b16 %v92
  %v559 = vunpack.c.l.b16 %v93
  %v560 = vunpack.c.h.b16 %v93
  %v561 = vunpack.c.l.b16 %v94
  %v562 = vunpack.c.h.b16 %v94
  %v563 = vunpack.c.l.b16 %v95
  %v564 = vunpack.c.h.b16 %v95
  %v565 = vunpack.c.l.b16 %v96
  %v566 = vunpack.c.h.b16 %v96
  %v567 = vunpack.c.l.b16 %v97
  %v568 = vunpack.c.h.b16 %v97
  %v569 = vunpack.c.l.b16 %v98
  %v570 = vunpack.c.h.b16 %v98
  %v571 = vunpack.c.l.b16 %v99
  %v572 = vunpack.c.h.b16 %v99
  %v573 = vunpack.c.l.b16 %v100
  %v574 = vunpack.c.h.b16 %v100
  %v575 = vunpack.c.l.b16 %v101
  %v576 = vunpack.c.h.b16 %v101
  %v577 = vunpack.c.l.b16 %v102
  %v578 = vunpack.c.h.b16 %v102
  %v579 = vunpack.c.l.b16 %v103
  %v580 = vunpack.c.h.b16 %v103
  %v581 = vunpack.c.l.b16 %v104
  %v582 = vunpack.c.h.b16 %v104
  %v583 = vunpack.c.l.b16 %v105
  %v584 = vunpack.c.h.b16 %v105
  %v585 = vunpack.c.l.b16 %v106
  %v586 = vunpack.c.h.b16 %v106
  %v587 = vunpack.c.l.b16 %v107
  %v588 = vunpack.c.h.b16 %v107
  %v589 = vunpack.c.l.b16 %v108
  %v590 = vunpack.c.h.b16 %v108
  %v591 = vunpack.c.l.b16 %v109
  %v592 = vunpack.c.h.b16 %v109
  %v593 = vunpack.c.l.b16 %v110
  %v594 = vunpack.c.h.b16 %v110
  %v595 = vunpack.c.l.b16 %v111
  %v596 = vunpack.c.h.b16 %v111
  %v597 = vunpack.c.l.b16 %v112
  %v598 = vunpack.c.h.b16 %v112
  %v599 = vunpack.c.l.b16 %v113
  %v600 = vunpack.c.h.b16 %v113
  %v601 = vunpack.c.l.b16 %v114
  %v602 = vunpack.c.h.b16 %v114
  %v603 = vunpack.c.l.b16 %v115
  %v604 = vunpack.c.h.b16 %v115
  %v605 = vunpack.c.l.b16 %v116
  %v606 = vunpack.c.h.b16 %v116
  %v607 = vunpack.c.l.b16 %v117
  %v608 = vunpack.c.h.b16 %v117
  %v609 = vunpack.c.l.b16 %v118
  %v610 = vunpack.c.h.b16 %v118
  %v611 = vunpack.c.l.b16 %v119
  %v612 = vunpack.c.h.b16 %v119
  %v613 = vunpack.c.l.b16 %v120
  %v614 = vunpack.c.h.b16 %v120
  %v615 = vunpack.c.l.b16 %v121
  %v616 = vunpack.c.h.b16 %v121
  %v617 = vunpack.c.l.b16 %v122
  %v618 = vunpack.c.h.b16 %v122
  %v619 = vunpack.c.l.b16 %v123
  %v620 = vunpack.c.h.b16 %v123
  %v621 = vunpack.c.l.b16 %v124
  %v622 = vunpack.c.h.b16 %v124
  %v623 = vunpack.c.l.b16 %v125
  %v624 = vunpack.c.h.b16 %v125
  %v625 = vunpack.c.l.b16 %v126
  %v626 = vunpack.c.h.b16 %v126
  %v627 = vunpack.c.l.b16 %v127
  %v628 = vunpack.c.h.b16 %v127
  %v629 = vunpack.c.l.b16 %v128
  %v630 = vunpack.c.h.b16 %v128
  %v631 = vunpack.c.l.b16 %v129
  %v632 = vunpack.c.h.b16 %v129
  %v633 = vunpack.c.l.b16 %v130
  %v634 = vunpack.c.h.b16 %v130
  %v635 = vunpack.c.l.b16 %v131
  %v636 = vunpack.c.h.b16 %v131
  %v637 = vunpack.c.l.b16 %v132
  %v638 = vunpack.c.h.b16 %v132
  %v639 = vunpack.c.l.b16 %v133
  %v640 = vunpack.c.h.b16 %v133
  %v641 = vunpack.c.l.b16 %v134
  %v642 = vunpack.c.h.b16 %v134
  %v643 = vunpack.c.l.b16 %v135
  %v644 = vunpack.c.h.b16 %v135
  %v645 = vunpack.c.l.b16 %v136
  %v646 = vunpack.c.h.b16 %v136
  %v647 = vunpack.c.l.b16 %v137
  %v648 = vunpack.c.h.b16 %v137
  %v649 = vunpack.c.l.b16 %v138
  %v650 = vunpack.c.h.b16 %v138
  %v651 = vunpack.c.l.b16 %v139
  %v652 = vunpack.c.h.b16 %v139
  %v653 = vunpack.c.l.b16 %v140
  %v654 = vunpack.c.h.b16 %v140
  %v655 = vunpack.c.l.b16 %v141
  %v656 = vunpack.c.h.b16 %v141
  %v657 = vunpack.c.l.b16 %v142
  %v658 = vunpack.c.h.b16 %v142
  %v659 = vunpack.c.l.b16 %v143
  %v660 = vunpack.c.h.b16 %v143
  %v661 = vunpack.c.l.b16 %v144
  %v662 = vunpack.c.h.b16 %v144
  %v663 = vunpack.c.l.b16 %v145
  %v664 = vunpack.c.h.b16 %v145
  %v665 = vunpack.c.l.b16 %v146
  %v666 = vunpack.c.h.b16 %v146
  %v667 = vunpack.c.l.b16 %v147
  %v668 = vunpack.c.h.b16 %v147
  %v669 = vunpack.c.l.b16 %v148
  %v670 = vunpack.c.h.b16 %v148
  %v671 = vunpack.c.l.b16 %v149
  %v672 = vunpack.c.h.b16 %v149
  %v673 = vunpack.c.l.b16 %v150
  %v674 = vunpack.c.h.b16 %v150
  %v675 = vunpack.c.l.b16 %v151
  %v676 = vunpack.c.h.b16 %v151
  %v677 = vunpack.c.l.b16 %v152
  %v678 = vunpack.c.h.b16 %v152
  %v679 = vunpack.c.l.b16 %v153
  %v680 = vunpack.c.h.b16 %v153
  %v681 = vunpack.c.l.b16 %v154
  %v682 = vunpack.c.h.b16 %v154
  %v683 = vunpack.c.l.b16 %v155
  %v684 = vunpack.c.h.b16 %v155
  %v685 = vunpack.c.l.b16 %v156
  %v686 = vunpack.c.h.b16 %v156
  %v687 = vunpack.c.l.b16 %v157
  %v688 = vunpack.c.h.b16 %v157
  %v689 = vunpack.c.l.b16 %v158
  %v690 = vunpack.c.h.b16 %v158
  %v691 = vunpack.c.l.b16 %v159
  %v692 = vunpack.c.h.b16 %v159
  %v693 = vunpack.c.l.b16 %v160
  %v694 = vunpack.c.h.b16 %v160
  %v695 = vunpack.c.l.b16 %v161
  %v696 = vunpack.c.h.b16 %v161
  %v697 = vunpack.c.l.b16 %v162
  %v698 = vunpack.c.h.b16 %v162
  %v699 = vunpack.c.l.b16 %v163
  %v700 = vunpack.c.h.b16 %v163
  %v701 = vunpack.c.l.b16 %v164
  %v702 = vunpack.c.h.b16 %v164
  %v703 = vunpack.c.l.b16 %v165
  %v704 = vunpack.c.h.b16 %v165
  %v705 = vunpack.c.l.b16 %v166
  %v706 = vunpack.c.h.b16 %v166
  %v707 = vunpack.c.l.b16 %v167
  %v708 = vunpack.c.h.b16 %v167
  %v709 = vunpack.c.l.b16 %v168
  %v710 = vunpack.c.h.b16 %v168
  %v711 = vunpack.c.l.b16 %v169
  %v712 = vunpack.c.h.b16 %v169
  %v713 = vunpack.c.l.b16 %v170
  %v714 = vunpack.c.h.b16 %v170
  %v715 = vunpack.c.l.b16 %v171
  %v716 = vunpack.c.h.b16 %v171
  %v717 = vunpack.c.l.b16 %v172
  %v718 = vunpack.c.h.b16 %v172
  %v719 = vunpack.c.l.b16 %v173
  %v720 = vunpack.c.h.b16 %v173
  %v721 = vunpack.c.l.b16 %v174
  %v722 = vunpack.c.h.b16 %v174
  %v723 = vunpack.c.l.b16 %v175
  %v724 = vunpack.c.h.b16 %v175
  %v725 = vunpack.c.l.b16 %v176
  %v726 = vunpack.c.h.b16 %v176
  %v727 = vunpack.c.l.b16 %v177
  %v728 = vunpack.c.h.b16 %v177
  %v729 = vunpack.c.l.b16 %v178
  %v730 = vunpack.c.h.b16 %v178
  %v731 = vunpack.c.l.b16 %v179
  %v732 = vunpack.c.h.b16 %v179
  %v733 = vunpack.c.l.b16 %v180
  %v734 = vunpack.c.h.b16 %v180
  %v735 = vunpack.c.l.b16 %v181
  %v736 = vunpack.c.h.b16 %v181
  %v737 = vunpack.c.l.b16 %v182
  %v738 = vunpack.c.h.b16 %v182
  %v739 = vunpack.c.l.b16 %v183
  %v740 = vunpack.c.h.b16 %v183
  %v741 = vunpack.c.l.b16 %v184
  %v742 = vunpack.c.h.b16 %v184
  %v743 = vunpack.c.l.b16 %v185
  %v744 = vunpack.c.h.b16 %v185
  %v745 = vunpack.c.l.b16 %v186
  %v746 = vunpack.c.h.b16 %v186
  %v747 = vunpack.c.l.b16 %v187
  %v748 = vunpack.c.h.b16 %v187
  %v749 = vunpack.c.l.b16 %v188
  %v750 = vunpack.c.h.b16 %v188
  %v751 = vunpack.c.l.b16 %v189
  %v752 = vunpack.c.h.b16 %v189
  %v753 = vunpack.c.l.b16 %v190
  %v754 = vunpack.c.h.b16 %v190
  %v755 = vunpack.c.l.b16 %v191
  %v756 = vunpack.c.h.b16 %v191
  %v757 = vunpack.c.l.b16 %v192
  %v758 = vunpack.c.h.b16 %v192
  %v759 = vunpack.c.l.b16 %v193
  %v760 = vunpack.c.h.b16 %v193
  %v761 = vunpack.c.l.b16 %v194
  %v762 = vunpack.c.h.b16 %v194
  %v763 = vunpack.c.l.b16 %v195
  %v764 = vunpack.c.h.b16 %v195
  %v765 = vunpack.c.l.b16 %v196
  %v766 = vunpack.c.h.b16 %v196
  %v767 = vunpack.c.l.b16 %v197
  %v768 = vunpack.c.h.b16 %v197
  %v769 = vunpack.c.l.b16 %v198
  %v770 = vunpack.c.h.b16 %v198
  %v771 = vunpack.c.l.b16 %v199
  %v772 = vunpack.c.h.b16 %v199
  %v773 = vunpack.c.l.b16 %v200
  %v774 = vunpack.c.h.b16 %v200
  %v775 = vunpack.c.l.b16 %v201
  %v776 = vunpack.c.h.b16 %v201
  %v777 = vunpack.c.l.b16 %v202
  %v778 = vunpack.c.h.b16 %v202
  %v779 = vunpack.c.l.b16 %v203
  %v780 = vunpack.c.h.b16 %v203
  %v781 = vunpack.c.l.b16 %v204
  %v782 = vunpack.c.h.b16 %v204
  %v783 = vunpack.c.l.b16 %v205
  %v784 = vunpack.c.h.b16 %v205
  %v785 = vunpack.c.l.b16 %v206
  %v786 = vunpack.c.h.b16 %v206
  %v787 = vunpack.c.l.b16 %v207
  %v788 = vunpack.c.h.b16 %v207
  %v789 = vunpack.c.l.b16 %v208
  %v790 = vunpack.c.h.b16 %v208
  %v791 = vunpack.c.l.b16 %v209
  %v792 = vunpack.c.h.b16 %v209
  %v793 = vunpack.c.l.b16 %v210
  %v794 = vunpack.c.h.b16 %v210
  %v795 = vunpack.c.l.b16 %v211
  %v796 = vunpack.c.h.b16 %v211
  %v797 = vunpack.c.l.b16 %v212
  %v798 = vunpack.c.h.b16 %v212
  %v799 = vunpack.c.l.b16 %v213
  %v800 = vunpack.c.h.b16 %v213
  %v801 = vunpack.c.l.b16 %v214
  %v802 = vunpack.c.h.b16 %v214
  %v803 = vunpack.c.l.b16 %v215
  %v804 = vunpack.c.h.b16 %v215
  %v805 = vunpack.c.l.b16 %v216
  %v806 = vunpack.c.h.b16 %v216
  %v807 = vunpack.c.l.b16 %v217
  %v808 = vunpack.c.h.b16 %v217
  %v809 = vunpack.c.l.b16 %v218
  %v810 = vunpack.c.h.b16 %v218
  %v811 = vunpack.c.l.b16 %v219
  %v812 = vunpack.c.h.b16 %v219
  %v813 = vunpack.c.l.b16 %v220
  %v814 = vunpack.c.h.b16 %v220
  %v815 = vunpack.c.l.b16 %v221
  %v816 = vunpack.c.h.b16 %v221
  %v817 = vunpack.c.l.b16 %v222
  %v818 = vunpack.c.h.b16 %v222
  %v819 = vunpack.c.l.b16 %v223
  %v820 = vunpack.c.h.b16 %v223
  %v821 = vunpack.c.l.b16 %v224
  %v822 = vunpack.c.h.b16 %v224
  %v823 = vunpack.c.l.b16 %v225
  %v824 = vunpack.c.h.b16 %v225
  %v825 = vunpack.c.l.b16 %v226
  %v826 = vunpack.c.h.b16 %v226
  %v827 = vunpack.c.l.b16 %v227
  %v828 = vunpack.c.h.b16 %v227
  %v829 = vunpack.c.l.b16 %v228
  %v830 = vunpack.c.h.b16 %v228
  %v831 = vunpack.c.l.b16 %v229
  %v832 = vunpack.c.h.b16 %v229
  %v833 = vunpack.c.l.b16 %v230
  %v834 = vunpack.c.h.b16 %v230
  %v835 = vunpack.c.l.b16 %v231
  %v836 = vunpack.c.h.b16 %v231
  %v837 = vunpack.c.l.b16 %v232
  %v838 = vunpack.c.h.b16 %v232
  %v839 = vunpack.c.l.b16 %v233
  %v840 = vunpack.c.h.b16 %v233
  %v841 = vunpack.c.l.b16 %v234
  %v842 = vunpack.c.h.b16 %v234
  %v843 = vunpack.c.l.b16 %v235
  %v844 = vunpack.c.h.b16 %v235
  %v845 = vunpack.c.l.b16 %v236
  %v846 = vunpack.c.h.b16 %v236
  %v847 = vpack.c.b16 %v459, %v455
  %v848 = vpack.c.b16 %v460, %v456
  %v849 = vpack.c.b16 %v461, %v457
  %v850 = vpack.c.b16 %v462, %v458
  %v851 = vpack.c.b16 %v467, %v463
  %v852 = vpack.c.b16 %v468, %v464
  %v853 = vpack.c.b16 %v469, %v465
  %v854 = vpack.c.b16 %v470, %v466
  %v855 = vpack.c.b16 %v475, %v471
  %v856 = vpack.c.b16 %v476, %v472
  %v857 = vpack.c.b16 %v477, %v473
  %v858 = vpack.c.b16 %v478, %v474
  %v859 = vpack.c.b16 %v483, %v479
  %v860 = vpack.c.b16 %v484, %v480
  %v861 = vpack.c.b16 %v485, %v481
  %v862 = vpack.c.b16 %v486, %v482
  %v863 = vpack.c.b16 %v491, %v487
  %v864 = vpack.c.b16 %v492, %v488
  %v865 = vpack.c.b16 %v493, %v489
  %v866 = vpack.c.b16 %v494, %v490
  %v867 = vpack.c.b16 %v499, %v495
  %v868 = vpack.c.b16 %v500, %v496
  %v869 = vpack.c.b16 %v501, %v497
  %v870 = vpack.c.b16 %v502, %v498
  %v871 = vpack.c.b16 %v507, %v503
  %v872 = vpack.c.b16 %v508, %v504
  %v873 = vpack.c.b16 %v509, %v505
  %v874 = vpack.c.b16 %v510, %v506
  %v875 = vpack.c.b16 %v515, %v511
  %v876 = vpack.c.b16 %v516, %v512
  %v877 = vpack.c.b16 %v517, %v513
  %v878 = vpack.c.b16 %v518, %v514
  %v879 = vpack.c.b16 %v523, %v519
  %v880 = vpack.c.b16 %v524, %v520
  %v881 = vpack.c.b16 %v525, %v521
  %v882 = vpack.c.b16 %v526, %v522
  %v883 = vpack.c.b16 %v531, %v527
  %v884 = vpack.c.b16 %v532, %v528
  %v885 = vpack.c.b16 %v533, %v529
  %v886 = vpack.c.b16 %v534, %v530
  %v887 = vpack.c.b16 %v539, %v535
  %v888 = vpack.c.b16 %v540, %v536
  %v889 = vpack.c.b16 %v541, %v537
  %v890 = vpack.c.b16 %v542, %v538
  %v891 = vpack.c.b16 %v547, %v543
  %v892 = vpack.c.b16 %v548, %v544
  %v893 = vpack.c.b16 %v549, %v545
  %v894 = vpack.c.b16 %v550, %v546
  %v895 = vpack.c.b16 %v555, %v551
  %v896 = vpack.c.b16 %v556, %v552
  %v897 = vpack.c.b16 %v557, %v553
  %v898 = vpack.c.b16 %v558, %v554
  %v899 = vpack.c.b16 %v563, %v559
  %v900 = vpack.c.b16 %v564, %v560
  %v901 = vpack.c.b16 %v565, %v561
  %v902 = vpack.c.b16 %v566, %v562
  %v903 = vpack.c.b16 %v571, %v567
  %v904 = vpack.c.b16 %v572, %v568
  %v905 = vpack.c.b16 %v573, %v569
  %v906 = vpack.c.b16 %v574, %v570
  %v907 = vpack.c.b16 %v579, %v575
  %v908 = vpack.c.b16 %v580, %v576
  %v909 = vpack.c.b16 %v581, %v577
  %v910 = vpack.c.b16 %v582, %v578
  %v911 = vpack.c.b16 %v587, %v583
  %v912 = vpack.c.b16 %v588, %v584
  %v913 = vpack.c.b16 %v589, %v585
  %v914 = vpack.c.b16 %v590, %v586
  %v915 = vpack.c.b16 %v595, %v591
  %v916 = vpack.c.b16 %v596, %v592
  %v917 = vpack.c.b16 %v597, %v593
  %v918 = vpack.c.b16 %v598, %v594
  %v919 = vpack.c.b16 %v603, %v599
  %v920 = vpack.c.b16 %v604, %v600
  %v921 = vpack.c.b16 %v605, %v601
  %v922 = vpack.c.b16 %v606, %v602
  %v923 = vpack.c.b16 %v611, %v607
  %v924 = vpack.c.b16 %v612, %v608
  %v925 = vpack.c.b16 %v613, %v609
  %v926 = vpack.c.b16 %v614, %v610
  %v927 = vpack.c.b16 %v619, %v615
  %v928 = vpack.c.b16 %v620, %v616
  %v929 = vpack.c.b16 %v621, %v617
  %v930 = vpack.c.b16 %v622, %v618
  %v931 = vpack.c.b16 %v627, %v623
  %v932 = vpack.c.b16 %v628, %v624
  %v933 = vpack.c.b16 %v629, %v625
  %v934 = vpack.c.b16 %v630, %v626
  %v935 = vpack.c.b16 %v635, %v631
  %v936 = vpack.c.b16 %v636, %v632
  %v937 = vpack.c.b16 %v637, %v633
  %v938 = vpack.c.b16 %v638, %v634
  %v939 = vpack.c.b16 %v643, %v639
  %v940 = vpack.c.b16 %v644, %v640
  %v941 = vpack.c.b16 %v645, %v641
  %v942 = vpack.c.b16 %v646, %v642
  %v943 = vpack.c.b16 %v651, %v647
  %v944 = vpack.c.b16 %v652, %v648
  %v945 = vpack.c.b16 %v653, %v649
  %v946 = vpack.c.b16 %v654, %v650
  %v947 = vpack.c.b16 %v659, %v655
  %v948 = vpack.c.b16 %v660, %v656
  %v949 = vpack.c.b16 %v661, %v657
  %v950 = vpack.c.b16 %v662, %v658
  %v951 = vpack.c.b16 %v667, %v663
  %v952 = vpack.c.b16 %v668, %v664
  %v953 = vpack.c.b16 %v669, %v665
  %v954 = vpack.c.b16 %v670, %v666
  %v955 = vpack.c.b16 %v675, %v671
  %v956 = vpack.c.b16 %v676, %v672
  %v957 = vpack.c.b16 %v677, %v673
  %v958 = vpack.c.b16 %v678, %v674
  %v959 = vpack.c.b16 %v683, %v679
  %v960 = vpack.c.b16 %v684, %v680
  %v961 = vpack.c.b16 %v685, %v681
  %v962 = vpack.c.b16 %v686, %v682
  %v963 = vpack.c.b16 %v691, %v687
  %v964 = vpack.c.b16 %v692, %v688
  %v965 = vpack.c.b16 %v693, %v689
  %v966 = vpack.c.b16 %v694, %v690
  %v967 = vpack.c.b16 %v699, %v695
  %v968 = vpack.c.b16 %v700, %v696
  %v969 = vpack.c.b16 %v701, %v697
  %v970 = vpack.c.b16 %v702, %v698
  %v971 = vpack.c.b16 %v707, %v703
  %v972 = vpack.c.b16 %v708, %v704
  %v973 = vpack.c.b16 %v709, %v705
  %v974 = vpack.c.b16 %v710, %v706
  %v975 = vpack.c.b16 %v715, %v711
  %v976 = vpack.c.b16 %v716, %v712
  %v977 = vpack.c.b16 %v717, %v713
  %v978 = vpack.c.b16 %v718, %v714
  %v979 = vpack.c.b16 %v723, %v719
  %v980 = vpack.c.b16 %v724, %v720
  %v981 = vpack.c.b16 %v725, %v721
  %v982 = vpack.c.b16 %v726, %v722
  %v983 = vpack.c.b16 %v731, %v727
  %v984 = vpack.c.b16 %v732, %v728
  %v985 = vpack.c.b16 %v733, %v729
  %v986 = vpack.c.b16 %v734, %v730
  %v987 = vpack.c.b16 %v739, %v735
  %v988 = vpack.c.b16 %v740, %v736
  %v989 = vpack.c.b16 %v741, %v737
  %v990 = vpack.c.b16 %v742, %v738
  %v991 = vpack.c.b16 %v747, %v743
  %v992 = vpack.c.b16 %v748, %v744
  %v993 = vpack.c.b16 %v749, %v745
  %v994 = vpack.c.b16 %v750, %v746
  %v995 = vpack.c.b16 %v755, %v751
  %v996 = vpack.c.b16 %v756, %v752
  %v997 = vpack.c.b16 %v757, %v753
  %v998 = vpack.c.b16 %v758, %v754
  %v999 = vpack.c.b16 %v763, %v759
  %v1000 = vpack.c.b16 %v764, %v760
  %v1001 = vpack.c.b16 %v765, %v761
  %v1002 = vpack.c.b16 %v766, %v762
  %v1003 = vpack.c.b16 %v771, %v767
  %v1004 = vpack.c.b16 %v772, %v768
  %v1005 = vpack.c.b16 %v773, %v769
  %v1006 = vpack.c.b16 %v774, %v770
  %v1007 = vpack.c.b16 %v779, %v775
  %v1008 = vpack.c.b16 %v780, %v776
  %v1009 = vpack.c.b16 %v781, %v777
  %v1010 = vpack.c.b16 %v782, %v778
  %v1011 = vpack.c.b16 %v787, %v783
  %v1012 = vpack.c.b16 %v788, %v784
  %v1013 = vpack.c.b16 %v789, %v785
  %v1014 = vpack.c.b16 %v790, %v786
  %v1015 = vpack.c.b16 %v795, %v791
  %v1016 = vpack.c.b16 %v796, %v792
  %v1017 = vpack.c.b16 %v797, %v793
  %v1018 = vpack.c.b16 %v798, %v794
  %v1019 = vpack.c.b16 %v803, %v799
  %v1020 = vpack.c.b16 %v804, %v800
  %v1021 = vpack.c.b16 %v805, %v801
  %v1022 = vpack.c.b16 %v806, %v802
  %v1023 = vpack.c.b16 %v811, %v807
  %v1024 = vpack.c.b16 %v812, %v808
  %v1025 = vpack.c.b16 %v813, %v809
  %v1026 = vpack.c.b16 %v814, %v810
  %v1027 = vpack.c.b16 %v819, %v815
  %v1028 = vpack.c.b16 %v820, %v816
  %v1029 = vpack.c.b16 %v821, %v817
  %v1030 = vpack.c.b16 %v822, %v818
  %v1031 = vpack.c.b16 %v827, %v823
  %v1032 = vpack.c.b16 %v828, %v824
  %v1033 = vpack.c.b16 %v829, %v825
  %v1034 = vpack.c.b16 %v830, %v826
  %v1035 = vpack.c.b16 %v835, %v831
  %v1036 = vpack.c.b16 %v836, %v832
  %v1037 = vpack.c.b16 %v837, %v833
  %v1038 = vpack.c.b16 %v838, %v834
  %v1039 = vpack.c.b16 %v843, %v839
  %v1040 = vpack.c.b16 %v844, %v840
  %v1041 = vpack.c.b16 %v845, %v841
  %v1042 = vpack.c.b16 %v846, %v842
  %vm1239 = vcmask 130048
  %v1241 = vsel %vm1239, %v40, 0
  %1243 = vmatprep.subr.bf16.mxu0 %v876
  %1244 = vmatpush1.bf16.msra.mxu0 %v875
  %1245 = vmatprep.subr.bf16.mxu0 %v872
  %1246 = vmatpush1.bf16.msra.mxu0 %v871
  %1247 = vmatprep.subr.bf16.mxu0 %v868
  %1248 = vmatpush1.bf16.msra.mxu0 %v867
  %1249 = vmatprep.subr.bf16.mxu0 %v864
  %1250 = vmatpush1.bf16.msra.mxu0 %v863
  %1251 = vmatprep.subr.bf16.mxu0 %v860
  %1252 = vmatpush1.bf16.msra.mxu0 %v859
  %1253 = vmatprep.subr.bf16.mxu0 %v856
  %1254 = vmatpush1.bf16.msra.mxu0 %v855
  %1255 = vmatprep.subr.bf16.mxu0 %v852
  %1256 = vmatpush1.bf16.msra.mxu0 %v851
  %1257 = vmatprep.subr.bf16.mxu0 %v848
  %1258 = vmatpush1.bf16.msra.mxu0 %v847
  %1259 = vmatprep.subr.bf16.mxu0 %v908
  %1260 = vmatpush2.bf16.msra.mxu0 %v907
  %1261 = vmatprep.subr.bf16.mxu0 %v904
  %1262 = vmatpush2.bf16.msra.mxu0 %v903
  %1263 = vmatprep.subr.bf16.mxu0 %v900
  %1264 = vmatpush2.bf16.msra.mxu0 %v899
  %1265 = vmatprep.subr.bf16.mxu0 %v896
  %1266 = vmatpush2.bf16.msra.mxu0 %v895
  %1267 = vmatprep.subr.bf16.mxu0 %v892
  %1268 = vmatpush2.bf16.msra.mxu0 %v891
  %1269 = vmatprep.subr.bf16.mxu0 %v888
  %1270 = vmatpush2.bf16.msra.mxu0 %v887
  %1271 = vmatprep.subr.bf16.mxu0 %v884
  %1272 = vmatpush2.bf16.msra.mxu0 %v883
  %1273 = vmatprep.subr.bf16.mxu0 %v880
  %1274 = vmatpush2.bf16.msra.mxu0 %v879
  %1275 = vmatprep.mubr.bf16.mxu0 %v35
  %1276 = vmatmul.mubr.bf16.gmra.mxu0 %v34
  %v1277 = vpop.f32.mrf.mxu0
  %v1278 = vadd.f32 %v242, %v1277
  %v1279 = vpop.f32.mrf.mxu0
  %v1280 = vadd.f32 %v246, %v1279
  %v1281 = vpop.f32.mrf.mxu0
  %v1282 = vpop.f32.mrf.mxu0
  %1283 = vdwg.mxu0
  %1284 = vmatprep.subr.bf16.mxu0 %v940
  %1285 = vmatpush1.bf16.msra.mxu0 %v939
  %1286 = vmatprep.subr.bf16.mxu0 %v936
  %1287 = vmatpush1.bf16.msra.mxu0 %v935
  %1288 = vmatprep.subr.bf16.mxu0 %v932
  %1289 = vmatpush1.bf16.msra.mxu0 %v931
  %1290 = vmatprep.subr.bf16.mxu0 %v928
  %1291 = vmatpush1.bf16.msra.mxu0 %v927
  %1292 = vmatprep.subr.bf16.mxu0 %v924
  %1293 = vmatpush1.bf16.msra.mxu0 %v923
  %1294 = vmatprep.subr.bf16.mxu0 %v920
  %1295 = vmatpush1.bf16.msra.mxu0 %v919
  %1296 = vmatprep.subr.bf16.mxu0 %v916
  %1297 = vmatpush1.bf16.msra.mxu0 %v915
  %1298 = vmatprep.subr.bf16.mxu0 %v912
  %1299 = vmatpush1.bf16.msra.mxu0 %v911
  %1300 = vmatprep.subr.bf16.mxu0 %v972
  %1301 = vmatpush2.bf16.msra.mxu0 %v971
  %1302 = vmatprep.subr.bf16.mxu0 %v968
  %1303 = vmatpush2.bf16.msra.mxu0 %v967
  %1304 = vmatprep.subr.bf16.mxu0 %v964
  %1305 = vmatpush2.bf16.msra.mxu0 %v963
  %1306 = vmatprep.subr.bf16.mxu0 %v960
  %1307 = vmatpush2.bf16.msra.mxu0 %v959
  %1308 = vmatprep.subr.bf16.mxu0 %v956
  %1309 = vmatpush2.bf16.msra.mxu0 %v955
  %1310 = vmatprep.subr.bf16.mxu0 %v952
  %1311 = vmatpush2.bf16.msra.mxu0 %v951
  %1312 = vmatprep.subr.bf16.mxu0 %v948
  %1313 = vmatpush2.bf16.msra.mxu0 %v947
  %1314 = vmatprep.subr.bf16.mxu0 %v944
  %1315 = vmatpush2.bf16.msra.mxu0 %v943
  %1316 = vmatprep.mubr.bf16.mxu0 %v37
  %1317 = vmatmul.mubr.bf16.gmra.mxu0 %v36
  %v1318 = vpop.f32.mrf.mxu0
  %v1319 = vadd.f32 %v1278, %v1318
  %v1320 = vpop.f32.mrf.mxu0
  %v1321 = vadd.f32 %v1280, %v1320
  %v1322 = vpop.f32.mrf.mxu0
  %v1323 = vpop.f32.mrf.mxu0
  %1324 = vdwg.mxu0
  %1325 = vmatprep.subr.bf16.mxu0 %v1004
  %1326 = vmatpush1.bf16.msra.mxu0 %v1003
  %1327 = vmatprep.subr.bf16.mxu0 %v1000
  %1328 = vmatpush1.bf16.msra.mxu0 %v999
  %1329 = vmatprep.subr.bf16.mxu0 %v996
  %1330 = vmatpush1.bf16.msra.mxu0 %v995
  %1331 = vmatprep.subr.bf16.mxu0 %v992
  %1332 = vmatpush1.bf16.msra.mxu0 %v991
  %1333 = vmatprep.subr.bf16.mxu0 %v988
  %1334 = vmatpush1.bf16.msra.mxu0 %v987
  %1335 = vmatprep.subr.bf16.mxu0 %v984
  %1336 = vmatpush1.bf16.msra.mxu0 %v983
  %1337 = vmatprep.subr.bf16.mxu0 %v980
  %1338 = vmatpush1.bf16.msra.mxu0 %v979
  %1339 = vmatprep.subr.bf16.mxu0 %v976
  %1340 = vmatpush1.bf16.msra.mxu0 %v975
  %1341 = vmatprep.subr.bf16.mxu0 %v1036
  %1342 = vmatpush2.bf16.msra.mxu0 %v1035
  %1343 = vmatprep.subr.bf16.mxu0 %v1032
  %1344 = vmatpush2.bf16.msra.mxu0 %v1031
  %1345 = vmatprep.subr.bf16.mxu0 %v1028
  %1346 = vmatpush2.bf16.msra.mxu0 %v1027
  %1347 = vmatprep.subr.bf16.mxu0 %v1024
  %1348 = vmatpush2.bf16.msra.mxu0 %v1023
  %1349 = vmatprep.subr.bf16.mxu0 %v1020
  %1350 = vmatpush2.bf16.msra.mxu0 %v1019
  %1351 = vmatprep.subr.bf16.mxu0 %v1016
  %1352 = vmatpush2.bf16.msra.mxu0 %v1015
  %1353 = vmatprep.subr.bf16.mxu0 %v1012
  %1354 = vmatpush2.bf16.msra.mxu0 %v1011
  %1355 = vmatprep.subr.bf16.mxu0 %v1008
  %1356 = vmatpush2.bf16.msra.mxu0 %v1007
  %1357 = vmatprep.mubr.bf16.mxu0 %v39
  %1358 = vmatmul.mubr.bf16.gmra.mxu0 %v38
  %v1359 = vpop.f32.mrf.mxu0
  %v1360 = vadd.f32 %v1319, %v1359
  %v1361 = vpop.f32.mrf.mxu0
  %v1362 = vadd.f32 %v1321, %v1361
  %v1363 = vpop.f32.mrf.mxu0
  %v1364 = vpop.f32.mrf.mxu0
  %1365 = vdwg.mxu0
  %1366 = vmatprep.subr.bf16.mxu0 0
  %1367 = vmatpush1.bf16.msra.mxu0 0
  %1368 = vmatprep.subr.bf16.mxu0 0
  %1369 = vmatpush1.bf16.msra.mxu0 0
  %1370 = vmatprep.subr.bf16.mxu0 0
  %1371 = vmatpush1.bf16.msra.mxu0 0
  %1372 = vmatprep.subr.bf16.mxu0 0
  %1373 = vmatpush1.bf16.msra.mxu0 0
  %1374 = vmatprep.subr.bf16.mxu0 0
  %1375 = vmatpush1.bf16.msra.mxu0 0
  %1376 = vmatprep.subr.bf16.mxu0 0
  %1377 = vmatpush1.bf16.msra.mxu0 0
  %1378 = vmatprep.subr.bf16.mxu0 0
  %1379 = vmatpush1.bf16.msra.mxu0 0
  %1380 = vmatprep.subr.bf16.mxu0 %v1040
  %1381 = vmatpush1.bf16.msra.mxu0 %v1039
  %1382 = vmatprep.subr.bf16.mxu0 0
  %1383 = vmatpush2.bf16.msra.mxu0 0
  %1384 = vmatprep.subr.bf16.mxu0 0
  %1385 = vmatpush2.bf16.msra.mxu0 0
  %1386 = vmatprep.subr.bf16.mxu0 0
  %1387 = vmatpush2.bf16.msra.mxu0 0
  %1388 = vmatprep.subr.bf16.mxu0 0
  %1389 = vmatpush2.bf16.msra.mxu0 0
  %1390 = vmatprep.subr.bf16.mxu0 0
  %1391 = vmatpush2.bf16.msra.mxu0 0
  %1392 = vmatprep.subr.bf16.mxu0 0
  %1393 = vmatpush2.bf16.msra.mxu0 0
  %1394 = vmatprep.subr.bf16.mxu0 0
  %1395 = vmatpush2.bf16.msra.mxu0 0
  %1396 = vmatprep.subr.bf16.mxu0 0
  %1397 = vmatpush2.bf16.msra.mxu0 0
  %1398 = vmatprep.mubr.bf16.mxu0 0
  %1399 = vmatmul.mubr.bf16.gmra.mxu0 %v1241
  %v1400 = vpop.f32.mrf.mxu0
  %v1401 = vadd.f32 %v1360, %v1400
  %v1402 = vpop.f32.mrf.mxu0
  %v1403 = vadd.f32 %v1362, %v1402
  %v1404 = vpop.f32.mrf.mxu0
  %v1405 = vpop.f32.mrf.mxu0
  %1406 = vdwg.mxu0
  %1407 = vmatprep.subr.bf16.mxu0 %v878
  %1408 = vmatpush1.bf16.msra.mxu0 %v877
  %1409 = vmatprep.subr.bf16.mxu0 %v874
  %1410 = vmatpush1.bf16.msra.mxu0 %v873
  %1411 = vmatprep.subr.bf16.mxu0 %v870
  %1412 = vmatpush1.bf16.msra.mxu0 %v869
  %1413 = vmatprep.subr.bf16.mxu0 %v866
  %1414 = vmatpush1.bf16.msra.mxu0 %v865
  %1415 = vmatprep.subr.bf16.mxu0 %v862
  %1416 = vmatpush1.bf16.msra.mxu0 %v861
  %1417 = vmatprep.subr.bf16.mxu0 %v858
  %1418 = vmatpush1.bf16.msra.mxu0 %v857
  %1419 = vmatprep.subr.bf16.mxu0 %v854
  %1420 = vmatpush1.bf16.msra.mxu0 %v853
  %1421 = vmatprep.subr.bf16.mxu0 %v850
  %1422 = vmatpush1.bf16.msra.mxu0 %v849
  %1423 = vmatprep.subr.bf16.mxu0 %v910
  %1424 = vmatpush2.bf16.msra.mxu0 %v909
  %1425 = vmatprep.subr.bf16.mxu0 %v906
  %1426 = vmatpush2.bf16.msra.mxu0 %v905
  %1427 = vmatprep.subr.bf16.mxu0 %v902
  %1428 = vmatpush2.bf16.msra.mxu0 %v901
  %1429 = vmatprep.subr.bf16.mxu0 %v898
  %1430 = vmatpush2.bf16.msra.mxu0 %v897
  %1431 = vmatprep.subr.bf16.mxu0 %v894
  %1432 = vmatpush2.bf16.msra.mxu0 %v893
  %1433 = vmatprep.subr.bf16.mxu0 %v890
  %1434 = vmatpush2.bf16.msra.mxu0 %v889
  %1435 = vmatprep.subr.bf16.mxu0 %v886
  %1436 = vmatpush2.bf16.msra.mxu0 %v885
  %1437 = vmatprep.subr.bf16.mxu0 %v882
  %1438 = vmatpush2.bf16.msra.mxu0 %v881
  %1439 = vmatprep.mubr.bf16.mxu0 %v35
  %1440 = vmatmul.mubr.bf16.gmra.mxu0 %v34
  %v1441 = vpop.f32.mrf.mxu0
  %v1442 = vadd.f32 %v250, %v1441
  %v1443 = vpop.f32.mrf.mxu0
  %v1444 = vadd.f32 %v254, %v1443
  %v1445 = vpop.f32.mrf.mxu0
  %v1446 = vpop.f32.mrf.mxu0
  %1447 = vdwg.mxu0
  %1448 = vmatprep.subr.bf16.mxu0 %v942
  %1449 = vmatpush1.bf16.msra.mxu0 %v941
  %1450 = vmatprep.subr.bf16.mxu0 %v938
  %1451 = vmatpush1.bf16.msra.mxu0 %v937
  %1452 = vmatprep.subr.bf16.mxu0 %v934
  %1453 = vmatpush1.bf16.msra.mxu0 %v933
  %1454 = vmatprep.subr.bf16.mxu0 %v930
  %1455 = vmatpush1.bf16.msra.mxu0 %v929
  %1456 = vmatprep.subr.bf16.mxu0 %v926
  %1457 = vmatpush1.bf16.msra.mxu0 %v925
  %1458 = vmatprep.subr.bf16.mxu0 %v922
  %1459 = vmatpush1.bf16.msra.mxu0 %v921
  %1460 = vmatprep.subr.bf16.mxu0 %v918
  %1461 = vmatpush1.bf16.msra.mxu0 %v917
  %1462 = vmatprep.subr.bf16.mxu0 %v914
  %1463 = vmatpush1.bf16.msra.mxu0 %v913
  %1464 = vmatprep.subr.bf16.mxu0 %v974
  %1465 = vmatpush2.bf16.msra.mxu0 %v973
  %1466 = vmatprep.subr.bf16.mxu0 %v970
  %1467 = vmatpush2.bf16.msra.mxu0 %v969
  %1468 = vmatprep.subr.bf16.mxu0 %v966
  %1469 = vmatpush2.bf16.msra.mxu0 %v965
  %1470 = vmatprep.subr.bf16.mxu0 %v962
  %1471 = vmatpush2.bf16.msra.mxu0 %v961
  %1472 = vmatprep.subr.bf16.mxu0 %v958
  %1473 = vmatpush2.bf16.msra.mxu0 %v957
  %1474 = vmatprep.subr.bf16.mxu0 %v954
  %1475 = vmatpush2.bf16.msra.mxu0 %v953
  %1476 = vmatprep.subr.bf16.mxu0 %v950
  %1477 = vmatpush2.bf16.msra.mxu0 %v949
  %1478 = vmatprep.subr.bf16.mxu0 %v946
  %1479 = vmatpush2.bf16.msra.mxu0 %v945
  %1480 = vmatprep.mubr.bf16.mxu0 %v37
  %1481 = vmatmul.mubr.bf16.gmra.mxu0 %v36
  %v1482 = vpop.f32.mrf.mxu0
  %v1483 = vadd.f32 %v1442, %v1482
  %v1484 = vpop.f32.mrf.mxu0
  %v1485 = vadd.f32 %v1444, %v1484
  %v1486 = vpop.f32.mrf.mxu0
  %v1487 = vpop.f32.mrf.mxu0
  %1488 = vdwg.mxu0
  %1489 = vmatprep.subr.bf16.mxu0 %v1006
  %1490 = vmatpush1.bf16.msra.mxu0 %v1005
  %1491 = vmatprep.subr.bf16.mxu0 %v1002
  %1492 = vmatpush1.bf16.msra.mxu0 %v1001
  %1493 = vmatprep.subr.bf16.mxu0 %v998
  %1494 = vmatpush1.bf16.msra.mxu0 %v997
  %1495 = vmatprep.subr.bf16.mxu0 %v994
  %1496 = vmatpush1.bf16.msra.mxu0 %v993
  %1497 = vmatprep.subr.bf16.mxu0 %v990
  %1498 = vmatpush1.bf16.msra.mxu0 %v989
  %1499 = vmatprep.subr.bf16.mxu0 %v986
  %1500 = vmatpush1.bf16.msra.mxu0 %v985
  %1501 = vmatprep.subr.bf16.mxu0 %v982
  %1502 = vmatpush1.bf16.msra.mxu0 %v981
  %1503 = vmatprep.subr.bf16.mxu0 %v978
  %1504 = vmatpush1.bf16.msra.mxu0 %v977
  %1505 = vmatprep.subr.bf16.mxu0 %v1038
  %1506 = vmatpush2.bf16.msra.mxu0 %v1037
  %1507 = vmatprep.subr.bf16.mxu0 %v1034
  %1508 = vmatpush2.bf16.msra.mxu0 %v1033
  %1509 = vmatprep.subr.bf16.mxu0 %v1030
  %1510 = vmatpush2.bf16.msra.mxu0 %v1029
  %1511 = vmatprep.subr.bf16.mxu0 %v1026
  %1512 = vmatpush2.bf16.msra.mxu0 %v1025
  %1513 = vmatprep.subr.bf16.mxu0 %v1022
  %1514 = vmatpush2.bf16.msra.mxu0 %v1021
  %1515 = vmatprep.subr.bf16.mxu0 %v1018
  %1516 = vmatpush2.bf16.msra.mxu0 %v1017
  %1517 = vmatprep.subr.bf16.mxu0 %v1014
  %1518 = vmatpush2.bf16.msra.mxu0 %v1013
  %1519 = vmatprep.subr.bf16.mxu0 %v1010
  %1520 = vmatpush2.bf16.msra.mxu0 %v1009
  %1521 = vmatprep.mubr.bf16.mxu0 %v39
  %1522 = vmatmul.mubr.bf16.gmra.mxu0 %v38
  %v1523 = vpop.f32.mrf.mxu0
  %v1524 = vadd.f32 %v1483, %v1523
  %v1525 = vpop.f32.mrf.mxu0
  %v1526 = vadd.f32 %v1485, %v1525
  %v1527 = vpop.f32.mrf.mxu0
  %v1528 = vpop.f32.mrf.mxu0
  %1529 = vdwg.mxu0
  %1530 = vmatprep.subr.bf16.mxu0 0
  %1531 = vmatpush1.bf16.msra.mxu0 0
  %1532 = vmatprep.subr.bf16.mxu0 0
  %1533 = vmatpush1.bf16.msra.mxu0 0
  %1534 = vmatprep.subr.bf16.mxu0 0
  %1535 = vmatpush1.bf16.msra.mxu0 0
  %1536 = vmatprep.subr.bf16.mxu0 0
  %1537 = vmatpush1.bf16.msra.mxu0 0
  %1538 = vmatprep.subr.bf16.mxu0 0
  %1539 = vmatpush1.bf16.msra.mxu0 0
  %1540 = vmatprep.subr.bf16.mxu0 0
  %1541 = vmatpush1.bf16.msra.mxu0 0
  %1542 = vmatprep.subr.bf16.mxu0 0
  %1543 = vmatpush1.bf16.msra.mxu0 0
  %1544 = vmatprep.subr.bf16.mxu0 %v1042
  %1545 = vmatpush1.bf16.msra.mxu0 %v1041
  %1546 = vmatprep.subr.bf16.mxu0 0
  %1547 = vmatpush2.bf16.msra.mxu0 0
  %1548 = vmatprep.subr.bf16.mxu0 0
  %1549 = vmatpush2.bf16.msra.mxu0 0
  %1550 = vmatprep.subr.bf16.mxu0 0
  %1551 = vmatpush2.bf16.msra.mxu0 0
  %1552 = vmatprep.subr.bf16.mxu0 0
  %1553 = vmatpush2.bf16.msra.mxu0 0
  %1554 = vmatprep.subr.bf16.mxu0 0
  %1555 = vmatpush2.bf16.msra.mxu0 0
  %1556 = vmatprep.subr.bf16.mxu0 0
  %1557 = vmatpush2.bf16.msra.mxu0 0
  %1558 = vmatprep.subr.bf16.mxu0 0
  %1559 = vmatpush2.bf16.msra.mxu0 0
  %1560 = vmatprep.subr.bf16.mxu0 0
  %1561 = vmatpush2.bf16.msra.mxu0 0
  %1562 = vmatprep.mubr.bf16.mxu0 0
  %1563 = vmatmul.mubr.bf16.gmra.mxu0 %v1241
  %v1564 = vpop.f32.mrf.mxu0
  %v1565 = vadd.f32 %v1524, %v1564
  %v1566 = vpop.f32.mrf.mxu0
  %v1567 = vadd.f32 %v1526, %v1566
  %v1568 = vpop.f32.mrf.mxu0
  %v1569 = vpop.f32.mrf.mxu0
  %1570 = vdwg.mxu0
  %vm1571 = vcmp.gt.f32.partialorder %v1401, 0.0
  %vm1572 = vcmp.gt.f32.partialorder %v1403, 0.0
  %vm1573 = vcmp.gt.f32.partialorder %v1565, 0.0
  %vm1574 = vcmp.gt.f32.partialorder %v1567, 0.0
  %v1575 = vmul.f32 %v1401, 0.2
  %v1576 = vmul.f32 %v1403, 0.2
  %v1577 = vmul.f32 %v1565, 0.2
  %v1578 = vmul.f32 %v1567, 0.2
  %v1579 = vsel %vm1571, %v1401, %v1575
  %v1580 = vsel %vm1572, %v1403, %v1576
  %v1581 = vsel %vm1573, %v1565, %v1577
  %v1582 = vsel %vm1574, %v1567, %v1578
  %v1583 = vpack.c.bf16 %v1579, %v1579
  %v1584 = vpack.c.bf16 %v1580, %v1580
  %v1585 = vpack.c.bf16 %v1581, %v1581
  %v1586 = vpack.c.bf16 %v1582, %v1582
  %v1587 = vld [vmem:[%s3] sm:$0xff]
  %v1588 = vld [vmem:[%s3 + $0x8] sm:$0xff]
  %v1589 = vld [vmem:[%s3 + $0x10] sm:$0xff]
  %v1590 = vld [vmem:[%s3 + $0x18] sm:$0xff]
  %v1591 = vld [vmem:[%s3 + $0x20] sm:$0xff]
  %v1592 = vld [vmem:[%s3 + $0x28] sm:$0xff]
  %v1593 = vld [vmem:[%s3 + $0x30] sm:$0xff]
  %v1594 = vld [vmem:[%s3 + $0x38] sm:$0xff]
  %v1595 = vld [vmem:[%s3 + $0x40] sm:$0xff]
  %v1596 = vld [vmem:[%s3 + $0x48] sm:$0xff]
  %v1597 = vld [vmem:[%s3 + $0x50] sm:$0xff]
  %v1598 = vld [vmem:[%s3 + $0x58] sm:$0xff]
  %v1599 = vld [vmem:[%s3 + $0x60] sm:$0xff]
  %v1600 = vld [vmem:[%s3 + $0x68] sm:$0xff]
  %v1601 = vld [vmem:[%s3 + $0x70] sm:$0xff]
  %v1602 = vld [vmem:[%s3 + $0x78] sm:$0xff]
  %v1603 = vld [vmem:[%s3 + $0x80] sm:$0xff]
  %v1604 = vld [vmem:[%s3 + $0x88] sm:$0xff]
  %v1605 = vld [vmem:[%s3 + $0x90] sm:$0xff]
  %v1606 = vld [vmem:[%s3 + $0x98] sm:$0xff]
  %v1607 = vld [vmem:[%s3 + $0xa0] sm:$0xff]
  %v1608 = vld [vmem:[%s3 + $0xa8] sm:$0xff]
  %v1609 = vld [vmem:[%s3 + $0xb0] sm:$0xff]
  %v1610 = vld [vmem:[%s3 + $0xb8] sm:$0xff]
  %v1611 = vld [vmem:[%s3 + $0xc0] sm:$0xff]
  %v1612 = vld [vmem:[%s3 + $0xc8] sm:$0xff]
  %v1613 = vld [vmem:[%s3 + $0xd0] sm:$0xff]
  %v1614 = vld [vmem:[%s3 + $0xd8] sm:$0xff]
  %v1615 = vld [vmem:[%s3 + $0xe0] sm:$0xff]
  %v1616 = vld [vmem:[%s3 + $0xe8] sm:$0xff]
  %v1617 = vld [vmem:[%s3 + $0xf0] sm:$0xff]
  %v1618 = vld [vmem:[%s3 + $0xf8] sm:$0xff]
  %v1619 = vld [vmem:[%s3 + $0x100] sm:$0xff]
  %v1620 = vld [vmem:[%s3 + $0x108] sm:$0xff]
  %v1621 = vld [vmem:[%s3 + $0x110] sm:$0xff]
  %v1622 = vld [vmem:[%s3 + $0x118] sm:$0xff]
  %v1623 = vld [vmem:[%s3 + $0x120] sm:$0xff]
  %v1624 = vld [vmem:[%s3 + $0x128] sm:$0xff]
  %v1625 = vld [vmem:[%s3 + $0x130] sm:$0xff]
  %v1626 = vld [vmem:[%s3 + $0x138] sm:$0xff]
  %v1627 = vld [vmem:[%s3 + $0x140] sm:$0xff]
  %v1628 = vld [vmem:[%s3 + $0x148] sm:$0xff]
  %v1629 = vld [vmem:[%s3 + $0x150] sm:$0xff]
  %v1630 = vld [vmem:[%s3 + $0x158] sm:$0xff]
  %v1631 = vld [vmem:[%s3 + $0x160] sm:$0xff]
  %v1632 = vld [vmem:[%s3 + $0x168] sm:$0xff]
  %v1633 = vld [vmem:[%s3 + $0x170] sm:$0xff]
  %v1634 = vld [vmem:[%s3 + $0x178] sm:$0xff]
  %v1635 = vld [vmem:[%s3 + $0x180] sm:$0xff]
  %v1636 = vld [vmem:[%s3 + $0x188] sm:$0xff]
  %v1637 = vld [vmem:[%s3 + $0x190] sm:$0xff]
  %v1638 = vld [vmem:[%s3 + $0x198] sm:$0xff]
  %v1639 = vld [vmem:[%s3 + $0x1a0] sm:$0xff]
  %v1640 = vld [vmem:[%s3 + $0x1a8] sm:$0xff]
  %v1641 = vld [vmem:[%s3 + $0x1b0] sm:$0xff]
  %v1642 = vld [vmem:[%s3 + $0x1b8] sm:$0xff]
  %v1643 = vld [vmem:[%s3 + $0x1c0] sm:$0xff]
  %v1644 = vld [vmem:[%s3 + $0x1c8] sm:$0xff]
  %v1645 = vld [vmem:[%s3 + $0x1d0] sm:$0xff]
  %v1646 = vld [vmem:[%s3 + $0x1d8] sm:$0xff]
  %v1647 = vld [vmem:[%s3 + $0x1e0] sm:$0xff]
  %v1648 = vld [vmem:[%s3 + $0x1e8] sm:$0xff]
  %v1649 = vld [vmem:[%s3 + $0x1f0] sm:$0xff]
  %v1650 = vld [vmem:[%s3 + $0x1f8] sm:$0xff]
  %v1651 = vld [vmem:[%s4] sm:$0x3]
  %v1653 = vlaneseq
  %v1654 = vshrl.u32 %v1653, 7
  %v1655 = vsub.s32 0, %v1654
  %v1656 = vrot.slane %v1651, %v1655
  %v1657 = vlaneseq
  %v1658 = vshrl.u32 %v1657, 7
  %v1659 = vsub.s32 1, %v1658
  %v1660 = vrot.slane %v1651, %v1659
  %v1727 = vunpack.c.l.b16 %v1587
  %v1728 = vunpack.c.h.b16 %v1587
  %v1729 = vunpack.c.l.b16 %v1588
  %v1730 = vunpack.c.h.b16 %v1588
  %v1731 = vunpack.c.l.b16 %v1589
  %v1732 = vunpack.c.h.b16 %v1589
  %v1733 = vunpack.c.l.b16 %v1590
  %v1734 = vunpack.c.h.b16 %v1590
  %v1735 = vunpack.c.l.b16 %v1591
  %v1736 = vunpack.c.h.b16 %v1591
  %v1737 = vunpack.c.l.b16 %v1592
  %v1738 = vunpack.c.h.b16 %v1592
  %v1739 = vunpack.c.l.b16 %v1593
  %v1740 = vunpack.c.h.b16 %v1593
  %v1741 = vunpack.c.l.b16 %v1594
  %v1742 = vunpack.c.h.b16 %v1594
  %v1743 = vunpack.c.l.b16 %v1595
  %v1744 = vunpack.c.h.b16 %v1595
  %v1745 = vunpack.c.l.b16 %v1596
  %v1746 = vunpack.c.h.b16 %v1596
  %v1747 = vunpack.c.l.b16 %v1597
  %v1748 = vunpack.c.h.b16 %v1597
  %v1749 = vunpack.c.l.b16 %v1598
  %v1750 = vunpack.c.h.b16 %v1598
  %v1751 = vunpack.c.l.b16 %v1599
  %v1752 = vunpack.c.h.b16 %v1599
  %v1753 = vunpack.c.l.b16 %v1600
  %v1754 = vunpack.c.h.b16 %v1600
  %v1755 = vunpack.c.l.b16 %v1601
  %v1756 = vunpack.c.h.b16 %v1601
  %v1757 = vunpack.c.l.b16 %v1602
  %v1758 = vunpack.c.h.b16 %v1602
  %v1759 = vunpack.c.l.b16 %v1603
  %v1760 = vunpack.c.h.b16 %v1603
  %v1761 = vunpack.c.l.b16 %v1604
  %v1762 = vunpack.c.h.b16 %v1604
  %v1763 = vunpack.c.l.b16 %v1605
  %v1764 = vunpack.c.h.b16 %v1605
  %v1765 = vunpack.c.l.b16 %v1606
  %v1766 = vunpack.c.h.b16 %v1606
  %v1767 = vunpack.c.l.b16 %v1607
  %v1768 = vunpack.c.h.b16 %v1607
  %v1769 = vunpack.c.l.b16 %v1608
  %v1770 = vunpack.c.h.b16 %v1608
  %v1771 = vunpack.c.l.b16 %v1609
  %v1772 = vunpack.c.h.b16 %v1609
  %v1773 = vunpack.c.l.b16 %v1610
  %v1774 = vunpack.c.h.b16 %v1610
  %v1775 = vunpack.c.l.b16 %v1611
  %v1776 = vunpack.c.h.b16 %v1611
  %v1777 = vunpack.c.l.b16 %v1612
  %v1778 = vunpack.c.h.b16 %v1612
  %v1779 = vunpack.c.l.b16 %v1613
  %v1780 = vunpack.c.h.b16 %v1613
  %v1781 = vunpack.c.l.b16 %v1614
  %v1782 = vunpack.c.h.b16 %v1614
  %v1783 = vunpack.c.l.b16 %v1615
  %v1784 = vunpack.c.h.b16 %v1615
  %v1785 = vunpack.c.l.b16 %v1616
  %v1786 = vunpack.c.h.b16 %v1616
  %v1787 = vunpack.c.l.b16 %v1617
  %v1788 = vunpack.c.h.b16 %v1617
  %v1789 = vunpack.c.l.b16 %v1618
  %v1790 = vunpack.c.h.b16 %v1618
  %v1791 = vunpack.c.l.b16 %v1619
  %v1792 = vunpack.c.h.b16 %v1619
  %v1793 = vunpack.c.l.b16 %v1620
  %v1794 = vunpack.c.h.b16 %v1620
  %v1795 = vunpack.c.l.b16 %v1621
  %v1796 = vunpack.c.h.b16 %v1621
  %v1797 = vunpack.c.l.b16 %v1622
  %v1798 = vunpack.c.h.b16 %v1622
  %v1799 = vunpack.c.l.b16 %v1623
  %v1800 = vunpack.c.h.b16 %v1623
  %v1801 = vunpack.c.l.b16 %v1624
  %v1802 = vunpack.c.h.b16 %v1624
  %v1803 = vunpack.c.l.b16 %v1625
  %v1804 = vunpack.c.h.b16 %v1625
  %v1805 = vunpack.c.l.b16 %v1626
  %v1806 = vunpack.c.h.b16 %v1626
  %v1807 = vunpack.c.l.b16 %v1627
  %v1808 = vunpack.c.h.b16 %v1627
  %v1809 = vunpack.c.l.b16 %v1628
  %v1810 = vunpack.c.h.b16 %v1628
  %v1811 = vunpack.c.l.b16 %v1629
  %v1812 = vunpack.c.h.b16 %v1629
  %v1813 = vunpack.c.l.b16 %v1630
  %v1814 = vunpack.c.h.b16 %v1630
  %v1815 = vunpack.c.l.b16 %v1631
  %v1816 = vunpack.c.h.b16 %v1631
  %v1817 = vunpack.c.l.b16 %v1632
  %v1818 = vunpack.c.h.b16 %v1632
  %v1819 = vunpack.c.l.b16 %v1633
  %v1820 = vunpack.c.h.b16 %v1633
  %v1821 = vunpack.c.l.b16 %v1634
  %v1822 = vunpack.c.h.b16 %v1634
  %v1823 = vunpack.c.l.b16 %v1635
  %v1824 = vunpack.c.h.b16 %v1635
  %v1825 = vunpack.c.l.b16 %v1636
  %v1826 = vunpack.c.h.b16 %v1636
  %v1827 = vunpack.c.l.b16 %v1637
  %v1828 = vunpack.c.h.b16 %v1637
  %v1829 = vunpack.c.l.b16 %v1638
  %v1830 = vunpack.c.h.b16 %v1638
  %v1831 = vunpack.c.l.b16 %v1639
  %v1832 = vunpack.c.h.b16 %v1639
  %v1833 = vunpack.c.l.b16 %v1640
  %v1834 = vunpack.c.h.b16 %v1640
  %v1835 = vunpack.c.l.b16 %v1641
  %v1836 = vunpack.c.h.b16 %v1641
  %v1837 = vunpack.c.l.b16 %v1642
  %v1838 = vunpack.c.h.b16 %v1642
  %v1839 = vunpack.c.l.b16 %v1643
  %v1840 = vunpack.c.h.b16 %v1643
  %v1841 = vunpack.c.l.b16 %v1644
  %v1842 = vunpack.c.h.b16 %v1644
  %v1843 = vunpack.c.l.b16 %v1645
  %v1844 = vunpack.c.h.b16 %v1645
  %v1845 = vunpack.c.l.b16 %v1646
  %v1846 = vunpack.c.h.b16 %v1646
  %v1847 = vunpack.c.l.b16 %v1647
  %v1848 = vunpack.c.h.b16 %v1647
  %v1849 = vunpack.c.l.b16 %v1648
  %v1850 = vunpack.c.h.b16 %v1648
  %v1851 = vunpack.c.l.b16 %v1649
  %v1852 = vunpack.c.h.b16 %v1649
  %v1853 = vunpack.c.l.b16 %v1650
  %v1854 = vunpack.c.h.b16 %v1650
  %v1855 = vpack.c.b16 %v1729, %v1727
  %v1856 = vpack.c.b16 %v1730, %v1728
  %v1857 = vpack.c.b16 %v1733, %v1731
  %v1858 = vpack.c.b16 %v1734, %v1732
  %v1859 = vpack.c.b16 %v1737, %v1735
  %v1860 = vpack.c.b16 %v1738, %v1736
  %v1861 = vpack.c.b16 %v1741, %v1739
  %v1862 = vpack.c.b16 %v1742, %v1740
  %v1863 = vpack.c.b16 %v1745, %v1743
  %v1864 = vpack.c.b16 %v1746, %v1744
  %v1865 = vpack.c.b16 %v1749, %v1747
  %v1866 = vpack.c.b16 %v1750, %v1748
  %v1867 = vpack.c.b16 %v1753, %v1751
  %v1868 = vpack.c.b16 %v1754, %v1752
  %v1869 = vpack.c.b16 %v1757, %v1755
  %v1870 = vpack.c.b16 %v1758, %v1756
  %v1871 = vpack.c.b16 %v1761, %v1759
  %v1872 = vpack.c.b16 %v1762, %v1760
  %v1873 = vpack.c.b16 %v1765, %v1763
  %v1874 = vpack.c.b16 %v1766, %v1764
  %v1875 = vpack.c.b16 %v1769, %v1767
  %v1876 = vpack.c.b16 %v1770, %v1768
  %v1877 = vpack.c.b16 %v1773, %v1771
  %v1878 = vpack.c.b16 %v1774, %v1772
  %v1879 = vpack.c.b16 %v1777, %v1775
  %v1880 = vpack.c.b16 %v1778, %v1776
  %v1881 = vpack.c.b16 %v1781, %v1779
  %v1882 = vpack.c.b16 %v1782, %v1780
  %v1883 = vpack.c.b16 %v1785, %v1783
  %v1884 = vpack.c.b16 %v1786, %v1784
  %v1885 = vpack.c.b16 %v1789, %v1787
  %v1886 = vpack.c.b16 %v1790, %v1788
  %v1887 = vpack.c.b16 %v1793, %v1791
  %v1888 = vpack.c.b16 %v1794, %v1792
  %v1889 = vpack.c.b16 %v1797, %v1795
  %v1890 = vpack.c.b16 %v1798, %v1796
  %v1891 = vpack.c.b16 %v1801, %v1799
  %v1892 = vpack.c.b16 %v1802, %v1800
  %v1893 = vpack.c.b16 %v1805, %v1803
  %v1894 = vpack.c.b16 %v1806, %v1804
  %v1895 = vpack.c.b16 %v1809, %v1807
  %v1896 = vpack.c.b16 %v1810, %v1808
  %v1897 = vpack.c.b16 %v1813, %v1811
  %v1898 = vpack.c.b16 %v1814, %v1812
  %v1899 = vpack.c.b16 %v1817, %v1815
  %v1900 = vpack.c.b16 %v1818, %v1816
  %v1901 = vpack.c.b16 %v1821, %v1819
  %v1902 = vpack.c.b16 %v1822, %v1820
  %v1903 = vpack.c.b16 %v1825, %v1823
  %v1904 = vpack.c.b16 %v1826, %v1824
  %v1905 = vpack.c.b16 %v1829, %v1827
  %v1906 = vpack.c.b16 %v1830, %v1828
  %v1907 = vpack.c.b16 %v1833, %v1831
  %v1908 = vpack.c.b16 %v1834, %v1832
  %v1909 = vpack.c.b16 %v1837, %v1835
  %v1910 = vpack.c.b16 %v1838, %v1836
  %v1911 = vpack.c.b16 %v1841, %v1839
  %v1912 = vpack.c.b16 %v1842, %v1840
  %v1913 = vpack.c.b16 %v1845, %v1843
  %v1914 = vpack.c.b16 %v1846, %v1844
  %v1915 = vpack.c.b16 %v1849, %v1847
  %v1916 = vpack.c.b16 %v1850, %v1848
  %v1917 = vpack.c.b16 %v1853, %v1851
  %v1918 = vpack.c.b16 %v1854, %v1852
  %1983 = vmatprep.subr.bf16.mxu0 %v1870
  %1984 = vmatpush1.bf16.msra.mxu0 %v1869
  %1985 = vmatprep.subr.bf16.mxu0 %v1868
  %1986 = vmatpush1.bf16.msra.mxu0 %v1867
  %1987 = vmatprep.subr.bf16.mxu0 %v1866
  %1988 = vmatpush1.bf16.msra.mxu0 %v1865
  %1989 = vmatprep.subr.bf16.mxu0 %v1864
  %1990 = vmatpush1.bf16.msra.mxu0 %v1863
  %1991 = vmatprep.subr.bf16.mxu0 %v1862
  %1992 = vmatpush1.bf16.msra.mxu0 %v1861
  %1993 = vmatprep.subr.bf16.mxu0 %v1860
  %1994 = vmatpush1.bf16.msra.mxu0 %v1859
  %1995 = vmatprep.subr.bf16.mxu0 %v1858
  %1996 = vmatpush1.bf16.msra.mxu0 %v1857
  %1997 = vmatprep.subr.bf16.mxu0 %v1856
  %1998 = vmatpush1.bf16.msra.mxu0 %v1855
  %1999 = vmatprep.subr.bf16.mxu0 %v1886
  %2000 = vmatpush2.bf16.msra.mxu0 %v1885
  %2001 = vmatprep.subr.bf16.mxu0 %v1884
  %2002 = vmatpush2.bf16.msra.mxu0 %v1883
  %2003 = vmatprep.subr.bf16.mxu0 %v1882
  %2004 = vmatpush2.bf16.msra.mxu0 %v1881
  %2005 = vmatprep.subr.bf16.mxu0 %v1880
  %2006 = vmatpush2.bf16.msra.mxu0 %v1879
  %2007 = vmatprep.subr.bf16.mxu0 %v1878
  %2008 = vmatpush2.bf16.msra.mxu0 %v1877
  %2009 = vmatprep.subr.bf16.mxu0 %v1876
  %2010 = vmatpush2.bf16.msra.mxu0 %v1875
  %2011 = vmatprep.subr.bf16.mxu0 %v1874
  %2012 = vmatpush2.bf16.msra.mxu0 %v1873
  %2013 = vmatprep.subr.bf16.mxu0 %v1872
  %2014 = vmatpush2.bf16.msra.mxu0 %v1871
  %2015 = vmatprep.mubr.bf16.mxu0 %v1584
  %2016 = vmatmul.mubr.bf16.gmra.mxu0 %v1583
  %v2017 = vpop.f32.mrf.mxu0
  %v2018 = vadd.f32 %v1656, %v2017
  %v2019 = vpop.f32.mrf.mxu0
  %v2020 = vadd.f32 %v1660, %v2019
  %v2021 = vpop.f32.mrf.mxu0
  %v2022 = vpop.f32.mrf.mxu0
  %2023 = vdwg.mxu0
  %2024 = vmatprep.subr.bf16.mxu0 %v1902
  %2025 = vmatpush1.bf16.msra.mxu0 %v1901
  %2026 = vmatprep.subr.bf16.mxu0 %v1900
  %2027 = vmatpush1.bf16.msra.mxu0 %v1899
  %2028 = vmatprep.subr.bf16.mxu0 %v1898
  %2029 = vmatpush1.bf16.msra.mxu0 %v1897
  %2030 = vmatprep.subr.bf16.mxu0 %v1896
  %2031 = vmatpush1.bf16.msra.mxu0 %v1895
  %2032 = vmatprep.subr.bf16.mxu0 %v1894
  %2033 = vmatpush1.bf16.msra.mxu0 %v1893
  %2034 = vmatprep.subr.bf16.mxu0 %v1892
  %2035 = vmatpush1.bf16.msra.mxu0 %v1891
  %2036 = vmatprep.subr.bf16.mxu0 %v1890
  %2037 = vmatpush1.bf16.msra.mxu0 %v1889
  %2038 = vmatprep.subr.bf16.mxu0 %v1888
  %2039 = vmatpush1.bf16.msra.mxu0 %v1887
  %2040 = vmatprep.subr.bf16.mxu0 %v1918
  %2041 = vmatpush2.bf16.msra.mxu0 %v1917
  %2042 = vmatprep.subr.bf16.mxu0 %v1916
  %2043 = vmatpush2.bf16.msra.mxu0 %v1915
  %2044 = vmatprep.subr.bf16.mxu0 %v1914
  %2045 = vmatpush2.bf16.msra.mxu0 %v1913
  %2046 = vmatprep.subr.bf16.mxu0 %v1912
  %2047 = vmatpush2.bf16.msra.mxu0 %v1911
  %2048 = vmatprep.subr.bf16.mxu0 %v1910
  %2049 = vmatpush2.bf16.msra.mxu0 %v1909
  %2050 = vmatprep.subr.bf16.mxu0 %v1908
  %2051 = vmatpush2.bf16.msra.mxu0 %v1907
  %2052 = vmatprep.subr.bf16.mxu0 %v1906
  %2053 = vmatpush2.bf16.msra.mxu0 %v1905
  %2054 = vmatprep.subr.bf16.mxu0 %v1904
  %2055 = vmatpush2.bf16.msra.mxu0 %v1903
  %2056 = vmatprep.mubr.bf16.mxu0 %v1586
  %2057 = vmatmul.mubr.bf16.gmra.mxu0 %v1585
  %v2058 = vpop.f32.mrf.mxu0
  %v2059 = vadd.f32 %v2018, %v2058
  %v2060 = vpop.f32.mrf.mxu0
  %v2061 = vadd.f32 %v2020, %v2060
  %v2062 = vpop.f32.mrf.mxu0
  %v2063 = vpop.f32.mrf.mxu0
  %2064 = vdwg.mxu0
  %vm2065 = vcmp.gt.f32.partialorder %v2059, 0.0
  %vm2066 = vcmp.gt.f32.partialorder %v2061, 0.0
  %v2067 = vmul.f32 %v2059, 0.2
  %v2068 = vmul.f32 %v2061, 0.2
  %v2069 = vsel %vm2065, %v2059, %v2067
  %v2070 = vsel %vm2066, %v2061, %v2068
  %v2071 = vpack.c.bf16 %v2069, %v2069
  %v2072 = vpack.c.bf16 %v2070, %v2070
  %v2073 = vld [vmem:[%s5] sm:$0xf]
  %v2074 = vld [vmem:[%s5 + $0x4] sm:$0xf]
  %v2075 = vld [vmem:[%s5 + $0x8] sm:$0xf]
  %v2076 = vld [vmem:[%s5 + $0xc] sm:$0xf]
  %v2077 = vld [vmem:[%s5 + $0x10] sm:$0xf]
  %v2078 = vld [vmem:[%s5 + $0x14] sm:$0xf]
  %v2079 = vld [vmem:[%s5 + $0x18] sm:$0xf]
  %v2080 = vld [vmem:[%s5 + $0x1c] sm:$0xf]
  %v2081 = vld [vmem:[%s5 + $0x20] sm:$0xf]
  %v2082 = vld [vmem:[%s5 + $0x24] sm:$0xf]
  %v2083 = vld [vmem:[%s5 + $0x28] sm:$0xf]
  %v2084 = vld [vmem:[%s5 + $0x2c] sm:$0xf]
  %v2085 = vld [vmem:[%s5 + $0x30] sm:$0xf]
  %v2086 = vld [vmem:[%s5 + $0x34] sm:$0xf]
  %v2087 = vld [vmem:[%s5 + $0x38] sm:$0xf]
  %v2088 = vld [vmem:[%s5 + $0x3c] sm:$0xf]
  %v2089 = vld [vmem:[%s5 + $0x40] sm:$0xf]
  %v2090 = vld [vmem:[%s5 + $0x44] sm:$0xf]
  %v2091 = vld [vmem:[%s5 + $0x48] sm:$0xf]
  %v2092 = vld [vmem:[%s5 + $0x4c] sm:$0xf]
  %v2093 = vld [vmem:[%s5 + $0x50] sm:$0xf]
  %v2094 = vld [vmem:[%s5 + $0x54] sm:$0xf]
  %v2095 = vld [vmem:[%s5 + $0x58] sm:$0xf]
  %v2096 = vld [vmem:[%s5 + $0x5c] sm:$0xf]
  %v2097 = vld [vmem:[%s5 + $0x60] sm:$0xf]
  %v2098 = vld [vmem:[%s5 + $0x64] sm:$0xf]
  %v2099 = vld [vmem:[%s5 + $0x68] sm:$0xf]
  %v2100 = vld [vmem:[%s5 + $0x6c] sm:$0xf]
  %v2101 = vld [vmem:[%s5 + $0x70] sm:$0xf]
  %v2102 = vld [vmem:[%s5 + $0x74] sm:$0xf]
  %v2103 = vld [vmem:[%s5 + $0x78] sm:$0xf]
  %v2104 = vld [vmem:[%s5 + $0x7c] sm:$0xf]
  %v2105 = vld [vmem:[%s6] sm:$0x1]
  %v2107 = vlaneseq
  %v2108 = vshrl.u32 %v2107, 7
  %v2109 = vsub.s32 0, %v2108
  %v2110 = vrot.slane %v2105, %v2109
  %v2144 = vunpack.c.l.b16 %v2073
  %v2145 = vunpack.c.l.b16 %v2074
  %v2146 = vunpack.c.l.b16 %v2075
  %v2147 = vunpack.c.l.b16 %v2076
  %v2148 = vunpack.c.l.b16 %v2077
  %v2149 = vunpack.c.l.b16 %v2078
  %v2150 = vunpack.c.l.b16 %v2079
  %v2151 = vunpack.c.l.b16 %v2080
  %v2152 = vunpack.c.l.b16 %v2081
  %v2153 = vunpack.c.l.b16 %v2082
  %v2154 = vunpack.c.l.b16 %v2083
  %v2155 = vunpack.c.l.b16 %v2084
  %v2156 = vunpack.c.l.b16 %v2085
  %v2157 = vunpack.c.l.b16 %v2086
  %v2158 = vunpack.c.l.b16 %v2087
  %v2159 = vunpack.c.l.b16 %v2088
  %v2160 = vunpack.c.l.b16 %v2089
  %v2161 = vunpack.c.l.b16 %v2090
  %v2162 = vunpack.c.l.b16 %v2091
  %v2163 = vunpack.c.l.b16 %v2092
  %v2164 = vunpack.c.l.b16 %v2093
  %v2165 = vunpack.c.l.b16 %v2094
  %v2166 = vunpack.c.l.b16 %v2095
  %v2167 = vunpack.c.l.b16 %v2096
  %v2168 = vunpack.c.l.b16 %v2097
  %v2169 = vunpack.c.l.b16 %v2098
  %v2170 = vunpack.c.l.b16 %v2099
  %v2171 = vunpack.c.l.b16 %v2100
  %v2172 = vunpack.c.l.b16 %v2101
  %v2173 = vunpack.c.l.b16 %v2102
  %v2174 = vunpack.c.l.b16 %v2103
  %v2175 = vunpack.c.l.b16 %v2104
  %v2176 = vpack.c.b16 %v2145, %v2144
  %v2177 = vpack.c.b16 %v2147, %v2146
  %v2178 = vpack.c.b16 %v2149, %v2148
  %v2179 = vpack.c.b16 %v2151, %v2150
  %v2180 = vpack.c.b16 %v2153, %v2152
  %v2181 = vpack.c.b16 %v2155, %v2154
  %v2182 = vpack.c.b16 %v2157, %v2156
  %v2183 = vpack.c.b16 %v2159, %v2158
  %v2184 = vpack.c.b16 %v2161, %v2160
  %v2185 = vpack.c.b16 %v2163, %v2162
  %v2186 = vpack.c.b16 %v2165, %v2164
  %v2187 = vpack.c.b16 %v2167, %v2166
  %v2188 = vpack.c.b16 %v2169, %v2168
  %v2189 = vpack.c.b16 %v2171, %v2170
  %v2190 = vpack.c.b16 %v2173, %v2172
  %v2191 = vpack.c.b16 %v2175, %v2174
  %2208 = vmatprep.subr.bf16.mxu0 0
  %2209 = vmatpush1.bf16.msra.mxu0 %v2183
  %2210 = vmatprep.subr.bf16.mxu0 0
  %2211 = vmatpush1.bf16.msra.mxu0 %v2182
  %2212 = vmatprep.subr.bf16.mxu0 0
  %2213 = vmatpush1.bf16.msra.mxu0 %v2181
  %2214 = vmatprep.subr.bf16.mxu0 0
  %2215 = vmatpush1.bf16.msra.mxu0 %v2180
  %2216 = vmatprep.subr.bf16.mxu0 0
  %2217 = vmatpush1.bf16.msra.mxu0 %v2179
  %2218 = vmatprep.subr.bf16.mxu0 0
  %2219 = vmatpush1.bf16.msra.mxu0 %v2178
  %2220 = vmatprep.subr.bf16.mxu0 0
  %2221 = vmatpush1.bf16.msra.mxu0 %v2177
  %2222 = vmatprep.subr.bf16.mxu0 0
  %2223 = vmatpush1.bf16.msra.mxu0 %v2176
  %2224 = vmatprep.subr.bf16.mxu0 0
  %2225 = vmatpush2.bf16.msra.mxu0 %v2191
  %2226 = vmatprep.subr.bf16.mxu0 0
  %2227 = vmatpush2.bf16.msra.mxu0 %v2190
  %2228 = vmatprep.subr.bf16.mxu0 0
  %2229 = vmatpush2.bf16.msra.mxu0 %v2189
  %2230 = vmatprep.subr.bf16.mxu0 0
  %2231 = vmatpush2.bf16.msra.mxu0 %v2188
  %2232 = vmatprep.subr.bf16.mxu0 0
  %2233 = vmatpush2.bf16.msra.mxu0 %v2187
  %2234 = vmatprep.subr.bf16.mxu0 0
  %2235 = vmatpush2.bf16.msra.mxu0 %v2186
  %2236 = vmatprep.subr.bf16.mxu0 0
  %2237 = vmatpush2.bf16.msra.mxu0 %v2185
  %2238 = vmatprep.subr.bf16.mxu0 0
  %2239 = vmatpush2.bf16.msra.mxu0 %v2184
  %2240 = vmatprep.mubr.bf16.mxu0 %v2072
  %2241 = vmatmul.mubr.bf16.gmra.mxu0 %v2071
  %v2242 = vpop.f32.mrf.mxu0
  %v2243 = vadd.f32 %v2110, %v2242
  %v2244 = vpop.f32.mrf.mxu0
  %v2245 = vpop.f32.mrf.mxu0
  %v2246 = vpop.f32.mrf.mxu0
  %2247 = vdwg.mxu0
  %2248 = vst [vmem:[%s7] sm:$0xff] %v2243
  // Predicated region
  $region30: #{discriminator_forward.1} parent=0 // pred_check
    _
  $region31: #{discriminator_forward.1} parent=0 // pred_check_branch
    %2250 = sbr.rel (0) target = $region33
  $region32: #{discriminator_forward.1} parent=0 // pred_region
    _
  $region33: #{discriminator_forward.1} parent=0 // pred_fallthru
    _
  // Predicated region
  $region34: #{discriminator_forward.1} parent=0 // pred_check
    _
  $region35: #{discriminator_forward.1} parent=0 // pred_check_branch
    %2252 = sbr.rel (0) target = $region37
  $region36: #{discriminator_forward.1} parent=0 // pred_region
    _
  $region37: #{discriminator_forward.1} parent=0 // pred_fallthru
    _

</llo_original>
